<compile_context>
chip_gen: v5e
topology: v5e:2x2
jax: 0.10.0
libtpu: 0.0.40
codegen_flags: <defaults>
</compile_context>

<pallas_src>
import functools

import numpy as np
import jax
import jax.numpy as jnp
from jax.experimental import pallas as pl
from jax.experimental.pallas import tpu as pltpu


# -----------------------------------------------------------------------------
# Fused forward kernel.
# Trunk activation layout: (H, N*W*C) float32, row = h, lane = n*W*C + w*C + c.
# -----------------------------------------------------------------------------
def _policy_net_kernel(x_ref,
                       m1_ref, b1_ref, m2_ref, b2_ref,
                       m3_ref, b3_ref, m4_ref, b4_ref,
                       mh_ref, bh_ref, pch_ref,
                       wl_ref, bl_ref,
                       o_ref,
                       xpad_ref, pf_ref,
                       *, n, h, w, c, kh, fs, data_off):
    f32 = jnp.float32
    eps = 1e-5
    pad = (kh - 1) // 2
    hp, lanes = xpad_ref.shape
    inv_cnt = 1.0 / float(n * h * w)          # 1 / (elements per channel)
    ho, wo = h - 2, w - 2
    in_f_pad = pf_ref.shape[1]

    # Zero only what needs zeroing: the halo rows of the padded activation
    # buffer and the padded tail lanes of the flatten buffer (everything else
    # is overwritten before it is read).
    xpad_ref[0:data_off, :] = jnp.zeros((data_off, lanes), f32)
    if data_off + h < hp:
        xpad_ref[data_off + h:hp, :] = jnp.zeros((hp - data_off - h, lanes), f32)
    if ho * fs < in_f_pad:
        pf_ref[:, ho * fs:in_f_pad] = jnp.zeros((n, in_f_pad - ho * fs), f32)

    pch = pch_ref[...]                         # (lanes, lanes) channel projection

    def conv_same(act, m_ref, b_ref):
        """stride-1 'same' conv: one aligned (h, lanes) store + kh banded MXU
        matmuls over the lane-packed, H-padded activation buffer."""
        xpad_ref[data_off:data_off + h, :] = act
        base = data_off - pad
        out = jnp.dot(xpad_ref[base:base + h, :], m_ref[0],
                      preferred_element_type=f32)
        for dy in range(1, kh):
            out = out + jnp.dot(xpad_ref[base + dy:base + dy + h, :], m_ref[dy],
                                preferred_element_type=f32)
        return out + b_ref[...]

    def bn_relu(act, res=None):
        """training-mode BatchNorm2d (gamma=1, beta=0, eps=1e-5, biased var),
        stats via ONE fused channel-projection matmul, + residual + ReLU."""
        s1 = jnp.sum(act, axis=0, keepdims=True)             # (1, lanes)
        s2 = jnp.sum(act * act, axis=0, keepdims=True)       # (1, lanes)
        proj = jnp.dot(jnp.concatenate([s1, s2], axis=0), pch,
                       preferred_element_type=f32) * inv_cnt  # (2, lanes)
        mean = proj[0:1, :]
        var = proj[1:2, :] - mean * mean
        y = (act - mean) * jax.lax.rsqrt(var + eps)
        if res is not None:
            y = y + res
        return jnp.maximum(y, 0.0)

    x0 = x_ref[...]                                           # (H, N*W*C)

    # residual block 1
    t = bn_relu(conv_same(x0, m1_ref, b1_ref))
    x1 = bn_relu(conv_same(t, m2_ref, b2_ref), res=x0)
    # residual block 2
    t = bn_relu(conv_same(x1, m3_ref, b3_ref))
    x2 = bn_relu(conv_same(t, m4_ref, b4_ref), res=x1)

    # policy head: 3x3 VALID conv to 1 channel as 3 banded MXU matmuls.
    # Output lanes: image n at [n*fs, n*fs + wo); lanes >= wo per image are 0.
    xpad_ref[data_off:data_off + h, :] = x2
    headacc = jnp.dot(xpad_ref[data_off:data_off + ho, :], mh_ref[0],
                      preferred_element_type=f32)
    for dy in range(1, 3):
        headacc = headacc + jnp.dot(
            xpad_ref[data_off + dy:data_off + dy + ho, :], mh_ref[dy],
            preferred_element_type=f32)
    head = headacc + bh_ref[...]                              # (ho, n*fs)

    # BatchNorm2d(1) + ReLU: scalar statistics over the n*ho*wo valid elements
    # (invalid lanes are exactly zero, so full-array sums are unaffected).
    inv_h = 1.0 / float(n * ho * wo)
    hm = jnp.sum(head) * inv_h
    hv = jnp.sum(head * head) * inv_h - hm * hm
    p = jnp.maximum((head - hm) * jax.lax.rsqrt(hv + eps), 0.0)  # (ho, n*fs)

    # Flatten: ho block stores of (N, fs).  Row hh of image n lands at lane
    # offset hh*fs of pf row n.  Lanes >= wo inside each block hold post-BN
    # garbage but hit zero rows of the (permuted, zero-padded) linear weight.
    for hh in range(ho):
        blk = jnp.concatenate([p[hh:hh + 1, i * fs:(i + 1) * fs]
                               for i in range(n)], axis=0)    # (n, fs)
        pf_ref[:, hh * fs:(hh + 1) * fs] = blk

    # final linear (MXU, K zero-padded and permuted at setup) + softmax.
    logits = (jnp.dot(pf_ref[...], wl_ref[...], preferred_element_type=f32)
              + bl_ref[...])
    mx = jnp.max(logits, axis=1, keepdims=True)
    ex = jnp.exp(logits - mx)
    o_ref[...] = ex / jnp.sum(ex, axis=1, keepdims=True)


# -----------------------------------------------------------------------------
# Wrapper: one layout change at entry, then a single pallas_call.
# -----------------------------------------------------------------------------
def policy_net_forward(x_nchw, kparams, args):
    n, c, h, w = x_nchw.shape
    assert c == args['conv_num_filters']
    kh = args['conv_kernel_size']
    pad = (kh - 1) // 2
    data_off = ((pad + 7) // 8) * 8                 # sublane-aligned data start
    hp = ((data_off + h + pad + 7) // 8) * 8        # padded rows (mult of 8)
    lanes = n * w * c

    # One-time layout change: NCHW (PyTorch) -> lane-packed (H, N*W*C).
    x = jnp.transpose(x_nchw, (2, 0, 3, 1)).astype(jnp.float32).reshape(h, lanes)

    in_f_pad = kparams['wl'].shape[0]
    out_f = kparams['wl'].shape[1]

    kernel = functools.partial(_policy_net_kernel, n=n, h=h, w=w, c=c, kh=kh,
                               fs=kparams['flat_stride'], data_off=data_off)
    return pl.pallas_call(
        kernel,
        out_shape=jax.ShapeDtypeStruct((n, out_f), jnp.float32),
        scratch_shapes=[
            pltpu.VMEM((hp, lanes), jnp.float32),   # H-halo / padded activations
            pltpu.VMEM((n, in_f_pad), jnp.float32),  # lane-aligned flatten buffer
        ],
    )(x,
      kparams['m1'], kparams['b1'], kparams['m2'], kparams['b2'],
      kparams['m3'], kparams['b3'], kparams['m4'], kparams['b4'],
      kparams['mh'], kparams['bh'], kparams['PCH'],
      kparams['wl'], kparams['bl'])


# -----------------------------------------------------------------------------
# Deterministic PyTorch-style parameter init (raw PyTorch layouts).
# -----------------------------------------------------------------------------
def init_params(key, args):
    C = args['conv_num_filters']
    K = args['conv_kernel_size']
    R, Col = args['RowNum'], args['ColNum']
    ks = jax.random.split(key, 12)

    def conv_init(kw_, kb_, cin, cout, ksz):
        bound = float(1.0 / (cin * ksz * ksz) ** 0.5)
        w = jax.random.uniform(kw_, (cout, cin, ksz, ksz), jnp.float32, -bound, bound)
        b = jax.random.uniform(kb_, (cout,), jnp.float32, -bound, bound)
        return w, b

    f1_w, f1_b = conv_init(ks[0], ks[1], C, C, K)
    s1_w, s1_b = conv_init(ks[2], ks[3], C, C, K)
    f2_w, f2_b = conv_init(ks[4], ks[5], C, C, K)
    s2_w, s2_b = conv_init(ks[6], ks[7], C, C, K)
    fc_w, fc_b = conv_init(ks[8], ks[9], C, 1, 3)

    in_f = (R - 2) * (Col - 2)
    out_f = R * Col
    bound = float(1.0 / in_f ** 0.5)
    lin_w = jax.random.uniform(ks[10], (out_f, in_f), jnp.float32, -bound, bound)
    lin_b = jax.random.uniform(ks[11], (out_f,), jnp.float32, -bound, bound)

    return dict(f1_w=f1_w, f1_b=f1_b, s1_w=s1_w, s1_b=s1_b,
                f2_w=f2_w, f2_b=f2_b, s2_w=s2_w, s2_b=s2_b,
                fc_w=fc_w, fc_b=fc_b, lin_w=lin_w, lin_b=lin_b)


# -----------------------------------------------------------------------------
# One-time setup: lower PyTorch weights into the lane-packed banded format.
# -----------------------------------------------------------------------------
def prepare_kernel_params(raw, args, n):
    C = args['conv_num_filters']
    K = args['conv_kernel_size']
    R, Col = args['RowNum'], args['ColNum']
    pad = (K - 1) // 2
    ho, wo = R - 2, Col - 2
    fs = 1
    while fs < wo:
        fs *= 2                                  # flatten stride (pow2 >= wo)
    eye_n = np.eye(n, dtype=np.float32)

    def same_conv_matrices(w_pt):
        # PyTorch (Cout, Cin, K, K) -> K banded matrices, block-diagonal over
        # the N images packed in lanes:
        # M[dy, n*W*Cin + wi*Cin + ci, n*W*Cout + wo*Cout + co]
        #   = w_pt[co, ci, dy, wi - wo + pad]
        w_np = np.asarray(w_pt, np.float32)
        cout, cin = w_np.shape[0], w_np.shape[1]
        m = np.zeros((K, Col * cin, Col * cout), np.float32)
        for dy in range(K):
            for wo_ in range(Col):
                for dx in range(K):
                    wi = wo_ + dx - pad
                    if 0 <= wi < Col:
                        m[dy, wi * cin:(wi + 1) * cin,
                          wo_ * cout:(wo_ + 1) * cout] = w_np[:, :, dy, dx].T
        mb = np.stack([np.kron(eye_n, m[dy]) for dy in range(K)])
        return jnp.asarray(mb)

    def same_conv_bias(b):
        row = np.tile(np.asarray(b, np.float32), Col)        # per-image (W*C,)
        return jnp.asarray(np.tile(row, n).reshape(1, -1))   # (1, N*W*C)

    def head_conv_matrices(w_pt):
        # (1, Cin, 3, 3) valid conv -> 3 banded (N*W*Cin, N*fs) matrices;
        # output lanes >= wo per image are zero columns.
        w_np = np.asarray(w_pt, np.float32)
        cin = w_np.shape[1]
        m = np.zeros((3, Col * cin, fs), np.float32)
        for dy in range(3):
            for wo_ in range(wo):
                for dx in range(3):
                    wi = wo_ + dx
                    m[dy, wi * cin:(wi + 1) * cin, wo_] = w_np[0, :, dy, dx]
        mb = np.stack([np.kron(eye_n, m[dy]) for dy in range(3)])
        return jnp.asarray(mb)

    # head bias row: fc_b at valid lanes, zero elsewhere (keeps invalid lanes 0).
    bh = np.zeros((1, n * fs), np.float32)
    for n0 in range(n):
        bh[0, n0 * fs:n0 * fs + wo] = float(np.asarray(raw['fc_b'], np.float32)[0])

    # same-channel projection matrix for per-channel BN statistics
    lane = np.arange(n * Col * C)
    pch = (lane[:, None] % C == lane[None, :] % C).astype(np.float32)

    # final linear: rows permuted to the in-kernel flatten layout
    # (row hh*fs + ww <-> PyTorch flat index hh*wo + ww), contraction dim
    # zero-padded to a multiple of 128.
    in_f_pad = -(-(ho * fs) // 128) * 128
    out_f = R * Col
    wl = np.zeros((in_f_pad, out_f), np.float32)
    wlt = np.asarray(raw['lin_w'], np.float32).T             # (in_f, out_f)
    for hh in range(ho):
        wl[hh * fs:hh * fs + wo, :] = wlt[hh * wo:(hh + 1) * wo, :]

    return dict(
        m1=same_conv_matrices(raw['f1_w']), b1=same_conv_bias(raw['f1_b']),
        m2=same_conv_matrices(raw['s1_w']), b2=same_conv_bias(raw['s1_b']),
        m3=same_conv_matrices(raw['f2_w']), b3=same_conv_bias(raw['f2_b']),
        m4=same_conv_matrices(raw['s2_w']), b4=same_conv_bias(raw['s2_b']),
        mh=head_conv_matrices(raw['fc_w']),
        bh=jnp.asarray(bh),
        PCH=jnp.asarray(pch),
        wl=jnp.asarray(wl),
        bl=jnp.asarray(np.asarray(raw['lin_b'], np.float32).reshape(1, out_f)),
        flat_stride=fs,
    )


# -----------------------------------------------------------------------------
# Pure-JAX reference (same semantics as the PyTorch module, train-mode BN).
# -----------------------------------------------------------------------------
def reference_forward(x_nchw, raw, args):
    P = jax.lax.Precision.HIGHEST
    pad = (args['conv_kernel_size'] - 1) // 2
    eps = 1e-5

    def conv(x, w, b, p_):
        y = jax.lax.conv_general_dilated(
            x, w, (1, 1), [(p_, p_), (p_, p_)],
            dimension_numbers=('NCHW', 'OIHW', 'NCHW'), precision=P)
        return y + b.reshape(1, -1, 1, 1)

    def bn(x):
        mean = jnp.mean(x, axis=(0, 2, 3), keepdims=True)
        var = jnp.mean(jnp.square(x - mean), axis=(0, 2, 3), keepdims=True)
        return (x - mean) * jax.lax.rsqrt(var + eps)

    x = x_nchw.astype(jnp.float32)
    t = x
    x = jax.nn.relu(bn(conv(x, raw['f1_w'], raw['f1_b'], pad)))
    x = jax.nn.relu(bn(conv(x, raw['s1_w'], raw['s1_b'], pad)) + t)
    t = x
    x = jax.nn.relu(bn(conv(x, raw['f2_w'], raw['f2_b'], pad)))
    x = jax.nn.relu(bn(conv(x, raw['s2_w'], raw['s2_b'], pad)) + t)
    p = jax.nn.relu(bn(conv(x, raw['fc_w'], raw['fc_b'], 0)))
    p = p.reshape(p.shape[0], -1)
    logits = jnp.dot(p, raw['lin_w'].T, precision=P) + raw['lin_b']
    return jax.nn.softmax(logits, axis=1)


if __name__ == "__main__":
    args = dict(conv_num_filters=4, conv_kernel_size=3, RowNum=16, ColNum=16)
    key = jax.random.PRNGKey(0)
    kx, kp = jax.random.split(key)
    # PyTorch-style NCHW input
    x = jax.random.normal(
        kx, (2, args['conv_num_filters'], args['RowNum'], args['ColNum']),
        jnp.float32)

    raw = init_params(kp, args)
    kparams = prepare_kernel_params(raw, args, n=x.shape[0])

    out = policy_net_forward(x, kparams, args)
    out = jax.block_until_ready(out)

    assert out.shape == (2, args['RowNum'] * args['ColNum'])
    assert bool(jnp.all(jnp.isfinite(out)))
    assert bool(jnp.allclose(jnp.sum(out, axis=1), 1.0, atol=1e-4))  # softmax rows

    ref = jax.block_until_ready(reference_forward(x, raw, args))
    assert bool(jnp.allclose(out, ref, atol=1e-4, rtol=1e-3)), (
        "max |diff| = %g" % float(jnp.max(jnp.abs(out - ref))))

    print("KERNEL_OK")
</pallas_src>

<mosaic_0001>
module attributes {stable_mosaic.version = 11 : i64} {
  func.func @_policy_net_kernel(%arg0: memref<16x128xf32, #tpu.memory_space<vmem>>, %arg1: memref<3x128x128xf32, #tpu.memory_space<vmem>>, %arg2: memref<1x128xf32, #tpu.memory_space<vmem>>, %arg3: memref<3x128x128xf32, #tpu.memory_space<vmem>>, %arg4: memref<1x128xf32, #tpu.memory_space<vmem>>, %arg5: memref<3x128x128xf32, #tpu.memory_space<vmem>>, %arg6: memref<1x128xf32, #tpu.memory_space<vmem>>, %arg7: memref<3x128x128xf32, #tpu.memory_space<vmem>>, %arg8: memref<1x128xf32, #tpu.memory_space<vmem>>, %arg9: memref<3x128x32xf32, #tpu.memory_space<vmem>>, %arg10: memref<1x32xf32, #tpu.memory_space<vmem>>, %arg11: memref<128x128xf32, #tpu.memory_space<vmem>>, %arg12: memref<256x256xf32, #tpu.memory_space<vmem>>, %arg13: memref<1x256xf32, #tpu.memory_space<vmem>>, %arg14: memref<2x256xf32, #tpu.memory_space<vmem>>, %arg15: memref<32x128xf32, #tpu.memory_space<vmem>>, %arg16: memref<2x256xf32, #tpu.memory_space<vmem>>) attributes {dimension_semantics = [], scalar_prefetch = 0 : i64, scratch_operands = 2 : i64, tpu.core_type = #tpu.core_type<tc>} {
    %cst = arith.constant 0.000000e+00 : f32
    %0 = vector.broadcast %cst : f32 to vector<8x128xf32>
    %c0 = arith.constant 0 : index
    %c0_0 = arith.constant 0 : index
    %1 = vector.load %arg15[%c0, %c0_0] : memref<32x128xf32, #tpu.memory_space<vmem>>, vector<8x128xf32>
    tpu.vector_store %arg15[%c0, %c0_0], %0 {strides = array<i32>} : memref<32x128xf32, #tpu.memory_space<vmem>>, vector<8x128xf32>,
    %cst_1 = arith.constant 0.000000e+00 : f32
    %2 = vector.broadcast %cst_1 : f32 to vector<8x128xf32>
    %c24 = arith.constant 24 : index
    %c0_2 = arith.constant 0 : index
    %3 = vector.load %arg15[%c24, %c0_2] : memref<32x128xf32, #tpu.memory_space<vmem>>, vector<8x128xf32>
    tpu.vector_store %arg15[%c24, %c0_2], %2 {strides = array<i32>} : memref<32x128xf32, #tpu.memory_space<vmem>>, vector<8x128xf32>,
    %cst_3 = arith.constant 0.000000e+00 : f32
    %4 = vector.broadcast %cst_3 : f32 to vector<2x32xf32>
    %c0_4 = arith.constant 0 : index
    %c224 = arith.constant 224 : index
    %5 = vector.load %arg16[%c0_4, %c224] : memref<2x256xf32, #tpu.memory_space<vmem>>, vector<2x32xf32>
    tpu.vector_store %arg16[%c0_4, %c224], %4 {strides = array<i32>} : memref<2x256xf32, #tpu.memory_space<vmem>>, vector<2x32xf32>,
    %c0_5 = arith.constant 0 : index
    %c0_6 = arith.constant 0 : index
    %6 = vector.load %arg11[%c0_5, %c0_6] : memref<128x128xf32, #tpu.memory_space<vmem>>, vector<128x128xf32>
    %c0_7 = arith.constant 0 : index
    %c0_8 = arith.constant 0 : index
    %7 = vector.load %arg0[%c0_7, %c0_8] : memref<16x128xf32, #tpu.memory_space<vmem>>, vector<16x128xf32>
    %c8 = arith.constant 8 : index
    %c0_9 = arith.constant 0 : index
    %8 = vector.load %arg15[%c8, %c0_9] : memref<32x128xf32, #tpu.memory_space<vmem>>, vector<16x128xf32>
    tpu.vector_store %arg15[%c8, %c0_9], %7 {strides = array<i32>} : memref<32x128xf32, #tpu.memory_space<vmem>>, vector<16x128xf32>,
    %c7 = arith.constant 7 : index
    %c0_10 = arith.constant 0 : index
    %9 = vector.load %arg15[%c7, %c0_10] : memref<32x128xf32, #tpu.memory_space<vmem>>, vector<16x128xf32>
    %c0_11 = arith.constant 0 : index
    %c0_12 = arith.constant 0 : index
    %c0_13 = arith.constant 0 : index
    %10 = vector.load %arg1[%c0_11, %c0_12, %c0_13] : memref<3x128x128xf32, #tpu.memory_space<vmem>>, vector<1x128x128xf32>
    %11 = vector.shape_cast %10 : vector<1x128x128xf32> to vector<128x128xf32>
    %cst_14 = arith.constant dense<0.000000e+00> : vector<16x128xf32>
    %12 = tpu.matmul %9, %11, %cst_14 {dimension_numbers = #tpu.dot_dimension_numbers<[1], [0], [0], [1], [0, 0, 1, 1], [], []>} : vector<16x128xf32>, vector<128x128xf32>, vector<16x128xf32> -> vector<16x128xf32>
    %c8_15 = arith.constant 8 : index
    %c0_16 = arith.constant 0 : index
    %13 = vector.load %arg15[%c8_15, %c0_16] : memref<32x128xf32, #tpu.memory_space<vmem>>, vector<16x128xf32>
    %c1 = arith.constant 1 : index
    %c0_17 = arith.constant 0 : index
    %c0_18 = arith.constant 0 : index
    %14 = vector.load %arg1[%c1, %c0_17, %c0_18] : memref<3x128x128xf32, #tpu.memory_space<vmem>>, vector<1x128x128xf32>
    %15 = vector.shape_cast %14 : vector<1x128x128xf32> to vector<128x128xf32>
    %cst_19 = arith.constant dense<0.000000e+00> : vector<16x128xf32>
    %16 = tpu.matmul %13, %15, %cst_19 {dimension_numbers = #tpu.dot_dimension_numbers<[1], [0], [0], [1], [0, 0, 1, 1], [], []>} : vector<16x128xf32>, vector<128x128xf32>, vector<16x128xf32> -> vector<16x128xf32>
    %17 = arith.addf %12, %16 : vector<16x128xf32>
    %c9 = arith.constant 9 : index
    %c0_20 = arith.constant 0 : index
    %18 = vector.load %arg15[%c9, %c0_20] : memref<32x128xf32, #tpu.memory_space<vmem>>, vector<16x128xf32>
    %c2 = arith.constant 2 : index
    %c0_21 = arith.constant 0 : index
    %c0_22 = arith.constant 0 : index
    %19 = vector.load %arg1[%c2, %c0_21, %c0_22] : memref<3x128x128xf32, #tpu.memory_space<vmem>>, vector<1x128x128xf32>
    %20 = vector.shape_cast %19 : vector<1x128x128xf32> to vector<128x128xf32>
    %cst_23 = arith.constant dense<0.000000e+00> : vector<16x128xf32>
    %21 = tpu.matmul %18, %20, %cst_23 {dimension_numbers = #tpu.dot_dimension_numbers<[1], [0], [0], [1], [0, 0, 1, 1], [], []>} : vector<16x128xf32>, vector<128x128xf32>, vector<16x128xf32> -> vector<16x128xf32>
    %22 = arith.addf %17, %21 : vector<16x128xf32>
    %c0_24 = arith.constant 0 : index
    %c0_25 = arith.constant 0 : index
    %23 = vector.load %arg2[%c0_24, %c0_25] : memref<1x128xf32, #tpu.memory_space<vmem>>, vector<1x128xf32>
    %24 = vector.broadcast %23 : vector<1x128xf32> to vector<16x128xf32>
    %25 = arith.addf %22, %24 : vector<16x128xf32>
    %cst_26 = arith.constant dense<0.000000e+00> : vector<128xf32>
    %26 = vector.multi_reduction <add>, %25, %cst_26 [0] : vector<16x128xf32> to vector<128xf32>
    %27 = vector.shape_cast %26 : vector<128xf32> to vector<1x128xf32>
    %28 = arith.mulf %25, %25 : vector<16x128xf32>
    %cst_27 = arith.constant dense<0.000000e+00> : vector<128xf32>
    %29 = vector.multi_reduction <add>, %28, %cst_27 [0] : vector<16x128xf32> to vector<128xf32>
    %30 = vector.shape_cast %29 : vector<128xf32> to vector<1x128xf32>
    %31 = tpu.concatenate %27, %30 in 0 : vector<1x128xf32>, vector<1x128xf32> -> vector<2x128xf32>
    %cst_28 = arith.constant dense<0.000000e+00> : vector<2x128xf32>
    %32 = tpu.matmul %31, %6, %cst_28 {dimension_numbers = #tpu.dot_dimension_numbers<[1], [0], [0], [1], [0, 0, 1, 1], [], []>} : vector<2x128xf32>, vector<128x128xf32>, vector<2x128xf32> -> vector<2x128xf32>
    %cst_29 = arith.constant 0.001953125 : f32
    %33 = vector.broadcast %cst_29 : f32 to vector<2x128xf32>
    %34 = arith.mulf %32, %33 : vector<2x128xf32>
    %35 = vector.extract_strided_slice %34 {offsets = [0, 0], sizes = [1, 128], strides = [1, 1]} : vector<2x128xf32> to vector<1x128xf32>
    %36 = vector.extract_strided_slice %34 {offsets = [1, 0], sizes = [1, 128], strides = [1, 1]} : vector<2x128xf32> to vector<1x128xf32>
    %37 = arith.mulf %35, %35 : vector<1x128xf32>
    %38 = arith.subf %36, %37 : vector<1x128xf32>
    %39 = vector.broadcast %35 : vector<1x128xf32> to vector<16x128xf32>
    %40 = arith.subf %25, %39 : vector<16x128xf32>
    %cst_30 = arith.constant 9.99999974E-6 : f32
    %41 = vector.broadcast %cst_30 : f32 to vector<1x128xf32>
    %42 = arith.addf %38, %41 : vector<1x128xf32>
    %43 = math.rsqrt %42 : vector<1x128xf32>
    %44 = vector.broadcast %43 : vector<1x128xf32> to vector<16x128xf32>
    %45 = arith.mulf %40, %44 : vector<16x128xf32>
    %cst_31 = arith.constant 0.000000e+00 : f32
    %46 = vector.broadcast %cst_31 : f32 to vector<16x128xf32>
    %47 = arith.maximumf %45, %46 : vector<16x128xf32>
    %c8_32 = arith.constant 8 : index
    %c0_33 = arith.constant 0 : index
    %48 = vector.load %arg15[%c8_32, %c0_33] : memref<32x128xf32, #tpu.memory_space<vmem>>, vector<16x128xf32>
    tpu.vector_store %arg15[%c8_32, %c0_33], %47 {strides = array<i32>} : memref<32x128xf32, #tpu.memory_space<vmem>>, vector<16x128xf32>,
    %c7_34 = arith.constant 7 : index
    %c0_35 = arith.constant 0 : index
    %49 = vector.load %arg15[%c7_34, %c0_35] : memref<32x128xf32, #tpu.memory_space<vmem>>, vector<16x128xf32>
    %c0_36 = arith.constant 0 : index
    %c0_37 = arith.constant 0 : index
    %c0_38 = arith.constant 0 : index
    %50 = vector.load %arg3[%c0_36, %c0_37, %c0_38] : memref<3x128x128xf32, #tpu.memory_space<vmem>>, vector<1x128x128xf32>
    %51 = vector.shape_cast %50 : vector<1x128x128xf32> to vector<128x128xf32>
    %cst_39 = arith.constant dense<0.000000e+00> : vector<16x128xf32>
    %52 = tpu.matmul %49, %51, %cst_39 {dimension_numbers = #tpu.dot_dimension_numbers<[1], [0], [0], [1], [0, 0, 1, 1], [], []>} : vector<16x128xf32>, vector<128x128xf32>, vector<16x128xf32> -> vector<16x128xf32>
    %c8_40 = arith.constant 8 : index
    %c0_41 = arith.constant 0 : index
    %53 = vector.load %arg15[%c8_40, %c0_41] : memref<32x128xf32, #tpu.memory_space<vmem>>, vector<16x128xf32>
    %c1_42 = arith.constant 1 : index
    %c0_43 = arith.constant 0 : index
    %c0_44 = arith.constant 0 : index
    %54 = vector.load %arg3[%c1_42, %c0_43, %c0_44] : memref<3x128x128xf32, #tpu.memory_space<vmem>>, vector<1x128x128xf32>
    %55 = vector.shape_cast %54 : vector<1x128x128xf32> to vector<128x128xf32>
    %cst_45 = arith.constant dense<0.000000e+00> : vector<16x128xf32>
    %56 = tpu.matmul %53, %55, %cst_45 {dimension_numbers = #tpu.dot_dimension_numbers<[1], [0], [0], [1], [0, 0, 1, 1], [], []>} : vector<16x128xf32>, vector<128x128xf32>, vector<16x128xf32> -> vector<16x128xf32>
    %57 = arith.addf %52, %56 : vector<16x128xf32>
    %c9_46 = arith.constant 9 : index
    %c0_47 = arith.constant 0 : index
    %58 = vector.load %arg15[%c9_46, %c0_47] : memref<32x128xf32, #tpu.memory_space<vmem>>, vector<16x128xf32>
    %c2_48 = arith.constant 2 : index
    %c0_49 = arith.constant 0 : index
    %c0_50 = arith.constant 0 : index
    %59 = vector.load %arg3[%c2_48, %c0_49, %c0_50] : memref<3x128x128xf32, #tpu.memory_space<vmem>>, vector<1x128x128xf32>
    %60 = vector.shape_cast %59 : vector<1x128x128xf32> to vector<128x128xf32>
    %cst_51 = arith.constant dense<0.000000e+00> : vector<16x128xf32>
    %61 = tpu.matmul %58, %60, %cst_51 {dimension_numbers = #tpu.dot_dimension_numbers<[1], [0], [0], [1], [0, 0, 1, 1], [], []>} : vector<16x128xf32>, vector<128x128xf32>, vector<16x128xf32> -> vector<16x128xf32>
    %62 = arith.addf %57, %61 : vector<16x128xf32>
    %c0_52 = arith.constant 0 : index
    %c0_53 = arith.constant 0 : index
    %63 = vector.load %arg4[%c0_52, %c0_53] : memref<1x128xf32, #tpu.memory_space<vmem>>, vector<1x128xf32>
    %64 = vector.broadcast %63 : vector<1x128xf32> to vector<16x128xf32>
    %65 = arith.addf %62, %64 : vector<16x128xf32>
    %cst_54 = arith.constant dense<0.000000e+00> : vector<128xf32>
    %66 = vector.multi_reduction <add>, %65, %cst_54 [0] : vector<16x128xf32> to vector<128xf32>
    %67 = vector.shape_cast %66 : vector<128xf32> to vector<1x128xf32>
    %68 = arith.mulf %65, %65 : vector<16x128xf32>
    %cst_55 = arith.constant dense<0.000000e+00> : vector<128xf32>
    %69 = vector.multi_reduction <add>, %68, %cst_55 [0] : vector<16x128xf32> to vector<128xf32>
    %70 = vector.shape_cast %69 : vector<128xf32> to vector<1x128xf32>
    %71 = tpu.concatenate %67, %70 in 0 : vector<1x128xf32>, vector<1x128xf32> -> vector<2x128xf32>
    %cst_56 = arith.constant dense<0.000000e+00> : vector<2x128xf32>
    %72 = tpu.matmul %71, %6, %cst_56 {dimension_numbers = #tpu.dot_dimension_numbers<[1], [0], [0], [1], [0, 0, 1, 1], [], []>} : vector<2x128xf32>, vector<128x128xf32>, vector<2x128xf32> -> vector<2x128xf32>
    %cst_57 = arith.constant 0.001953125 : f32
    %73 = vector.broadcast %cst_57 : f32 to vector<2x128xf32>
    %74 = arith.mulf %72, %73 : vector<2x128xf32>
    %75 = vector.extract_strided_slice %74 {offsets = [0, 0], sizes = [1, 128], strides = [1, 1]} : vector<2x128xf32> to vector<1x128xf32>
    %76 = vector.extract_strided_slice %74 {offsets = [1, 0], sizes = [1, 128], strides = [1, 1]} : vector<2x128xf32> to vector<1x128xf32>
    %77 = arith.mulf %75, %75 : vector<1x128xf32>
    %78 = arith.subf %76, %77 : vector<1x128xf32>
    %79 = vector.broadcast %75 : vector<1x128xf32> to vector<16x128xf32>
    %80 = arith.subf %65, %79 : vector<16x128xf32>
    %cst_58 = arith.constant 9.99999974E-6 : f32
    %81 = vector.broadcast %cst_58 : f32 to vector<1x128xf32>
    %82 = arith.addf %78, %81 : vector<1x128xf32>
    %83 = math.rsqrt %82 : vector<1x128xf32>
    %84 = vector.broadcast %83 : vector<1x128xf32> to vector<16x128xf32>
    %85 = arith.mulf %80, %84 : vector<16x128xf32>
    %86 = arith.addf %85, %7 : vector<16x128xf32>
    %cst_59 = arith.constant 0.000000e+00 : f32
    %87 = vector.broadcast %cst_59 : f32 to vector<16x128xf32>
    %88 = arith.maximumf %86, %87 : vector<16x128xf32>
    %c8_60 = arith.constant 8 : index
    %c0_61 = arith.constant 0 : index
    %89 = vector.load %arg15[%c8_60, %c0_61] : memref<32x128xf32, #tpu.memory_space<vmem>>, vector<16x128xf32>
    tpu.vector_store %arg15[%c8_60, %c0_61], %88 {strides = array<i32>} : memref<32x128xf32, #tpu.memory_space<vmem>>, vector<16x128xf32>,
    %c7_62 = arith.constant 7 : index
    %c0_63 = arith.constant 0 : index
    %90 = vector.load %arg15[%c7_62, %c0_63] : memref<32x128xf32, #tpu.memory_space<vmem>>, vector<16x128xf32>
    %c0_64 = arith.constant 0 : index
    %c0_65 = arith.constant 0 : index
    %c0_66 = arith.constant 0 : index
    %91 = vector.load %arg5[%c0_64, %c0_65, %c0_66] : memref<3x128x128xf32, #tpu.memory_space<vmem>>, vector<1x128x128xf32>
    %92 = vector.shape_cast %91 : vector<1x128x128xf32> to vector<128x128xf32>
    %cst_67 = arith.constant dense<0.000000e+00> : vector<16x128xf32>
    %93 = tpu.matmul %90, %92, %cst_67 {dimension_numbers = #tpu.dot_dimension_numbers<[1], [0], [0], [1], [0, 0, 1, 1], [], []>} : vector<16x128xf32>, vector<128x128xf32>, vector<16x128xf32> -> vector<16x128xf32>
    %c8_68 = arith.constant 8 : index
    %c0_69 = arith.constant 0 : index
    %94 = vector.load %arg15[%c8_68, %c0_69] : memref<32x128xf32, #tpu.memory_space<vmem>>, vector<16x128xf32>
    %c1_70 = arith.constant 1 : index
    %c0_71 = arith.constant 0 : index
    %c0_72 = arith.constant 0 : index
    %95 = vector.load %arg5[%c1_70, %c0_71, %c0_72] : memref<3x128x128xf32, #tpu.memory_space<vmem>>, vector<1x128x128xf32>
    %96 = vector.shape_cast %95 : vector<1x128x128xf32> to vector<128x128xf32>
    %cst_73 = arith.constant dense<0.000000e+00> : vector<16x128xf32>
    %97 = tpu.matmul %94, %96, %cst_73 {dimension_numbers = #tpu.dot_dimension_numbers<[1], [0], [0], [1], [0, 0, 1, 1], [], []>} : vector<16x128xf32>, vector<128x128xf32>, vector<16x128xf32> -> vector<16x128xf32>
    %98 = arith.addf %93, %97 : vector<16x128xf32>
    %c9_74 = arith.constant 9 : index
    %c0_75 = arith.constant 0 : index
    %99 = vector.load %arg15[%c9_74, %c0_75] : memref<32x128xf32, #tpu.memory_space<vmem>>, vector<16x128xf32>
    %c2_76 = arith.constant 2 : index
    %c0_77 = arith.constant 0 : index
    %c0_78 = arith.constant 0 : index
    %100 = vector.load %arg5[%c2_76, %c0_77, %c0_78] : memref<3x128x128xf32, #tpu.memory_space<vmem>>, vector<1x128x128xf32>
    %101 = vector.shape_cast %100 : vector<1x128x128xf32> to vector<128x128xf32>
    %cst_79 = arith.constant dense<0.000000e+00> : vector<16x128xf32>
    %102 = tpu.matmul %99, %101, %cst_79 {dimension_numbers = #tpu.dot_dimension_numbers<[1], [0], [0], [1], [0, 0, 1, 1], [], []>} : vector<16x128xf32>, vector<128x128xf32>, vector<16x128xf32> -> vector<16x128xf32>
    %103 = arith.addf %98, %102 : vector<16x128xf32>
    %c0_80 = arith.constant 0 : index
    %c0_81 = arith.constant 0 : index
    %104 = vector.load %arg6[%c0_80, %c0_81] : memref<1x128xf32, #tpu.memory_space<vmem>>, vector<1x128xf32>
    %105 = vector.broadcast %104 : vector<1x128xf32> to vector<16x128xf32>
    %106 = arith.addf %103, %105 : vector<16x128xf32>
    %cst_82 = arith.constant dense<0.000000e+00> : vector<128xf32>
    %107 = vector.multi_reduction <add>, %106, %cst_82 [0] : vector<16x128xf32> to vector<128xf32>
    %108 = vector.shape_cast %107 : vector<128xf32> to vector<1x128xf32>
    %109 = arith.mulf %106, %106 : vector<16x128xf32>
    %cst_83 = arith.constant dense<0.000000e+00> : vector<128xf32>
    %110 = vector.multi_reduction <add>, %109, %cst_83 [0] : vector<16x128xf32> to vector<128xf32>
    %111 = vector.shape_cast %110 : vector<128xf32> to vector<1x128xf32>
    %112 = tpu.concatenate %108, %111 in 0 : vector<1x128xf32>, vector<1x128xf32> -> vector<2x128xf32>
    %cst_84 = arith.constant dense<0.000000e+00> : vector<2x128xf32>
    %113 = tpu.matmul %112, %6, %cst_84 {dimension_numbers = #tpu.dot_dimension_numbers<[1], [0], [0], [1], [0, 0, 1, 1], [], []>} : vector<2x128xf32>, vector<128x128xf32>, vector<2x128xf32> -> vector<2x128xf32>
    %cst_85 = arith.constant 0.001953125 : f32
    %114 = vector.broadcast %cst_85 : f32 to vector<2x128xf32>
    %115 = arith.mulf %113, %114 : vector<2x128xf32>
    %116 = vector.extract_strided_slice %115 {offsets = [0, 0], sizes = [1, 128], strides = [1, 1]} : vector<2x128xf32> to vector<1x128xf32>
    %117 = vector.extract_strided_slice %115 {offsets = [1, 0], sizes = [1, 128], strides = [1, 1]} : vector<2x128xf32> to vector<1x128xf32>
    %118 = arith.mulf %116, %116 : vector<1x128xf32>
    %119 = arith.subf %117, %118 : vector<1x128xf32>
    %120 = vector.broadcast %116 : vector<1x128xf32> to vector<16x128xf32>
    %121 = arith.subf %106, %120 : vector<16x128xf32>
    %cst_86 = arith.constant 9.99999974E-6 : f32
    %122 = vector.broadcast %cst_86 : f32 to vector<1x128xf32>
    %123 = arith.addf %119, %122 : vector<1x128xf32>
    %124 = math.rsqrt %123 : vector<1x128xf32>
    %125 = vector.broadcast %124 : vector<1x128xf32> to vector<16x128xf32>
    %126 = arith.mulf %121, %125 : vector<16x128xf32>
    %cst_87 = arith.constant 0.000000e+00 : f32
    %127 = vector.broadcast %cst_87 : f32 to vector<16x128xf32>
    %128 = arith.maximumf %126, %127 : vector<16x128xf32>
    %c8_88 = arith.constant 8 : index
    %c0_89 = arith.constant 0 : index
    %129 = vector.load %arg15[%c8_88, %c0_89] : memref<32x128xf32, #tpu.memory_space<vmem>>, vector<16x128xf32>
    tpu.vector_store %arg15[%c8_88, %c0_89], %128 {strides = array<i32>} : memref<32x128xf32, #tpu.memory_space<vmem>>, vector<16x128xf32>,
    %c7_90 = arith.constant 7 : index
    %c0_91 = arith.constant 0 : index
    %130 = vector.load %arg15[%c7_90, %c0_91] : memref<32x128xf32, #tpu.memory_space<vmem>>, vector<16x128xf32>
    %c0_92 = arith.constant 0 : index
    %c0_93 = arith.constant 0 : index
    %c0_94 = arith.constant 0 : index
    %131 = vector.load %arg7[%c0_92, %c0_93, %c0_94] : memref<3x128x128xf32, #tpu.memory_space<vmem>>, vector<1x128x128xf32>
    %132 = vector.shape_cast %131 : vector<1x128x128xf32> to vector<128x128xf32>
    %cst_95 = arith.constant dense<0.000000e+00> : vector<16x128xf32>
    %133 = tpu.matmul %130, %132, %cst_95 {dimension_numbers = #tpu.dot_dimension_numbers<[1], [0], [0], [1], [0, 0, 1, 1], [], []>} : vector<16x128xf32>, vector<128x128xf32>, vector<16x128xf32> -> vector<16x128xf32>
    %c8_96 = arith.constant 8 : index
    %c0_97 = arith.constant 0 : index
    %134 = vector.load %arg15[%c8_96, %c0_97] : memref<32x128xf32, #tpu.memory_space<vmem>>, vector<16x128xf32>
    %c1_98 = arith.constant 1 : index
    %c0_99 = arith.constant 0 : index
    %c0_100 = arith.constant 0 : index
    %135 = vector.load %arg7[%c1_98, %c0_99, %c0_100] : memref<3x128x128xf32, #tpu.memory_space<vmem>>, vector<1x128x128xf32>
    %136 = vector.shape_cast %135 : vector<1x128x128xf32> to vector<128x128xf32>
    %cst_101 = arith.constant dense<0.000000e+00> : vector<16x128xf32>
    %137 = tpu.matmul %134, %136, %cst_101 {dimension_numbers = #tpu.dot_dimension_numbers<[1], [0], [0], [1], [0, 0, 1, 1], [], []>} : vector<16x128xf32>, vector<128x128xf32>, vector<16x128xf32> -> vector<16x128xf32>
    %138 = arith.addf %133, %137 : vector<16x128xf32>
    %c9_102 = arith.constant 9 : index
    %c0_103 = arith.constant 0 : index
    %139 = vector.load %arg15[%c9_102, %c0_103] : memref<32x128xf32, #tpu.memory_space<vmem>>, vector<16x128xf32>
    %c2_104 = arith.constant 2 : index
    %c0_105 = arith.constant 0 : index
    %c0_106 = arith.constant 0 : index
    %140 = vector.load %arg7[%c2_104, %c0_105, %c0_106] : memref<3x128x128xf32, #tpu.memory_space<vmem>>, vector<1x128x128xf32>
    %141 = vector.shape_cast %140 : vector<1x128x128xf32> to vector<128x128xf32>
    %cst_107 = arith.constant dense<0.000000e+00> : vector<16x128xf32>
    %142 = tpu.matmul %139, %141, %cst_107 {dimension_numbers = #tpu.dot_dimension_numbers<[1], [0], [0], [1], [0, 0, 1, 1], [], []>} : vector<16x128xf32>, vector<128x128xf32>, vector<16x128xf32> -> vector<16x128xf32>
    %143 = arith.addf %138, %142 : vector<16x128xf32>
    %c0_108 = arith.constant 0 : index
    %c0_109 = arith.constant 0 : index
    %144 = vector.load %arg8[%c0_108, %c0_109] : memref<1x128xf32, #tpu.memory_space<vmem>>, vector<1x128xf32>
    %145 = vector.broadcast %144 : vector<1x128xf32> to vector<16x128xf32>
    %146 = arith.addf %143, %145 : vector<16x128xf32>
    %cst_110 = arith.constant dense<0.000000e+00> : vector<128xf32>
    %147 = vector.multi_reduction <add>, %146, %cst_110 [0] : vector<16x128xf32> to vector<128xf32>
    %148 = vector.shape_cast %147 : vector<128xf32> to vector<1x128xf32>
    %149 = arith.mulf %146, %146 : vector<16x128xf32>
    %cst_111 = arith.constant dense<0.000000e+00> : vector<128xf32>
    %150 = vector.multi_reduction <add>, %149, %cst_111 [0] : vector<16x128xf32> to vector<128xf32>
    %151 = vector.shape_cast %150 : vector<128xf32> to vector<1x128xf32>
    %152 = tpu.concatenate %148, %151 in 0 : vector<1x128xf32>, vector<1x128xf32> -> vector<2x128xf32>
    %cst_112 = arith.constant dense<0.000000e+00> : vector<2x128xf32>
    %153 = tpu.matmul %152, %6, %cst_112 {dimension_numbers = #tpu.dot_dimension_numbers<[1], [0], [0], [1], [0, 0, 1, 1], [], []>} : vector<2x128xf32>, vector<128x128xf32>, vector<2x128xf32> -> vector<2x128xf32>
    %cst_113 = arith.constant 0.001953125 : f32
    %154 = vector.broadcast %cst_113 : f32 to vector<2x128xf32>
    %155 = arith.mulf %153, %154 : vector<2x128xf32>
    %156 = vector.extract_strided_slice %155 {offsets = [0, 0], sizes = [1, 128], strides = [1, 1]} : vector<2x128xf32> to vector<1x128xf32>
    %157 = vector.extract_strided_slice %155 {offsets = [1, 0], sizes = [1, 128], strides = [1, 1]} : vector<2x128xf32> to vector<1x128xf32>
    %158 = arith.mulf %156, %156 : vector<1x128xf32>
    %159 = arith.subf %157, %158 : vector<1x128xf32>
    %160 = vector.broadcast %156 : vector<1x128xf32> to vector<16x128xf32>
    %161 = arith.subf %146, %160 : vector<16x128xf32>
    %cst_114 = arith.constant 9.99999974E-6 : f32
    %162 = vector.broadcast %cst_114 : f32 to vector<1x128xf32>
    %163 = arith.addf %159, %162 : vector<1x128xf32>
    %164 = math.rsqrt %163 : vector<1x128xf32>
    %165 = vector.broadcast %164 : vector<1x128xf32> to vector<16x128xf32>
    %166 = arith.mulf %161, %165 : vector<16x128xf32>
    %167 = arith.addf %166, %88 : vector<16x128xf32>
    %cst_115 = arith.constant 0.000000e+00 : f32
    %168 = vector.broadcast %cst_115 : f32 to vector<16x128xf32>
    %169 = arith.maximumf %167, %168 : vector<16x128xf32>
    %c8_116 = arith.constant 8 : index
    %c0_117 = arith.constant 0 : index
    %170 = vector.load %arg15[%c8_116, %c0_117] : memref<32x128xf32, #tpu.memory_space<vmem>>, vector<16x128xf32>
    tpu.vector_store %arg15[%c8_116, %c0_117], %169 {strides = array<i32>} : memref<32x128xf32, #tpu.memory_space<vmem>>, vector<16x128xf32>,
    %c8_118 = arith.constant 8 : index
    %c0_119 = arith.constant 0 : index
    %171 = vector.load %arg15[%c8_118, %c0_119] : memref<32x128xf32, #tpu.memory_space<vmem>>, vector<14x128xf32>
    %c0_120 = arith.constant 0 : index
    %c0_121 = arith.constant 0 : index
    %c0_122 = arith.constant 0 : index
    %172 = vector.load %arg9[%c0_120, %c0_121, %c0_122] : memref<3x128x32xf32, #tpu.memory_space<vmem>>, vector<1x128x32xf32>
    %173 = vector.shape_cast %172 : vector<1x128x32xf32> to vector<128x32xf32>
    %cst_123 = arith.constant dense<0.000000e+00> : vector<14x32xf32>
    %174 = tpu.matmul %171, %173, %cst_123 {dimension_numbers = #tpu.dot_dimension_numbers<[1], [0], [0], [1], [0, 0, 1, 1], [], []>} : vector<14x128xf32>, vector<128x32xf32>, vector<14x32xf32> -> vector<14x32xf32>
    %c9_124 = arith.constant 9 : index
    %c0_125 = arith.constant 0 : index
    %175 = vector.load %arg15[%c9_124, %c0_125] : memref<32x128xf32, #tpu.memory_space<vmem>>, vector<14x128xf32>
    %c1_126 = arith.constant 1 : index
    %c0_127 = arith.constant 0 : index
    %c0_128 = arith.constant 0 : index
    %176 = vector.load %arg9[%c1_126, %c0_127, %c0_128] : memref<3x128x32xf32, #tpu.memory_space<vmem>>, vector<1x128x32xf32>
    %177 = vector.shape_cast %176 : vector<1x128x32xf32> to vector<128x32xf32>
    %cst_129 = arith.constant dense<0.000000e+00> : vector<14x32xf32>
    %178 = tpu.matmul %175, %177, %cst_129 {dimension_numbers = #tpu.dot_dimension_numbers<[1], [0], [0], [1], [0, 0, 1, 1], [], []>} : vector<14x128xf32>, vector<128x32xf32>, vector<14x32xf32> -> vector<14x32xf32>
    %179 = arith.addf %174, %178 : vector<14x32xf32>
    %c10 = arith.constant 10 : index
    %c0_130 = arith.constant 0 : index
    %180 = vector.load %arg15[%c10, %c0_130] : memref<32x128xf32, #tpu.memory_space<vmem>>, vector<14x128xf32>
    %c2_131 = arith.constant 2 : index
    %c0_132 = arith.constant 0 : index
    %c0_133 = arith.constant 0 : index
    %181 = vector.load %arg9[%c2_131, %c0_132, %c0_133] : memref<3x128x32xf32, #tpu.memory_space<vmem>>, vector<1x128x32xf32>
    %182 = vector.shape_cast %181 : vector<1x128x32xf32> to vector<128x32xf32>
    %cst_134 = arith.constant dense<0.000000e+00> : vector<14x32xf32>
    %183 = tpu.matmul %180, %182, %cst_134 {dimension_numbers = #tpu.dot_dimension_numbers<[1], [0], [0], [1], [0, 0, 1, 1], [], []>} : vector<14x128xf32>, vector<128x32xf32>, vector<14x32xf32> -> vector<14x32xf32>
    %184 = arith.addf %179, %183 : vector<14x32xf32>
    %c0_135 = arith.constant 0 : index
    %c0_136 = arith.constant 0 : index
    %185 = vector.load %arg10[%c0_135, %c0_136] : memref<1x32xf32, #tpu.memory_space<vmem>>, vector<1x32xf32>
    %186 = vector.broadcast %185 : vector<1x32xf32> to vector<14x32xf32>
    %187 = arith.addf %184, %186 : vector<14x32xf32>
    %188 = vector.shape_cast %187 : vector<14x32xf32> to vector<1x14x32xf32>
    %cst_137 = arith.constant dense<0.000000e+00> : vector<1xf32>
    %189 = vector.multi_reduction <add>, %188, %cst_137 [1, 2] : vector<1x14x32xf32> to vector<1xf32>
    %190 = vector.shape_cast %189 : vector<1xf32> to vector<1x1x1xf32>
    %191 = vector.extract %190[0, 0, 0] : f32 from vector<1x1x1xf32>
    %cst_138 = arith.constant 0.00255102036 : f32
    %192 = arith.mulf %191, %cst_138 : f32
    %193 = arith.mulf %187, %187 : vector<14x32xf32>
    %194 = vector.shape_cast %193 : vector<14x32xf32> to vector<1x14x32xf32>
    %cst_139 = arith.constant dense<0.000000e+00> : vector<1xf32>
    %195 = vector.multi_reduction <add>, %194, %cst_139 [1, 2] : vector<1x14x32xf32> to vector<1xf32>
    %196 = vector.shape_cast %195 : vector<1xf32> to vector<1x1x1xf32>
    %197 = vector.extract %196[0, 0, 0] : f32 from vector<1x1x1xf32>
    %cst_140 = arith.constant 0.00255102036 : f32
    %198 = arith.mulf %197, %cst_140 : f32
    %199 = arith.mulf %192, %192 : f32
    %200 = arith.subf %198, %199 : f32
    %201 = vector.broadcast %192 : f32 to vector<14x32xf32>
    %202 = arith.subf %187, %201 : vector<14x32xf32>
    %cst_141 = arith.constant 9.99999974E-6 : f32
    %203 = arith.addf %200, %cst_141 : f32
    %204 = math.rsqrt %203 : f32
    %205 = vector.broadcast %204 : f32 to vector<14x32xf32>
    %206 = arith.mulf %202, %205 : vector<14x32xf32>
    %cst_142 = arith.constant 0.000000e+00 : f32
    %207 = vector.broadcast %cst_142 : f32 to vector<14x32xf32>
    %208 = arith.maximumf %206, %207 : vector<14x32xf32>
    %209 = vector.extract_strided_slice %208 {offsets = [0, 0], sizes = [1, 16], strides = [1, 1]} : vector<14x32xf32> to vector<1x16xf32>
    %210 = vector.extract_strided_slice %208 {offsets = [0, 16], sizes = [1, 16], strides = [1, 1]} : vector<14x32xf32> to vector<1x16xf32>
    %211 = tpu.concatenate %209, %210 in 0 : vector<1x16xf32>, vector<1x16xf32> -> vector<2x16xf32>
    %c0_143 = arith.constant 0 : index
    %c0_144 = arith.constant 0 : index
    %212 = vector.load %arg16[%c0_143, %c0_144] : memref<2x256xf32, #tpu.memory_space<vmem>>, vector<2x16xf32>
    tpu.vector_store %arg16[%c0_143, %c0_144], %211 {strides = array<i32>} : memref<2x256xf32, #tpu.memory_space<vmem>>, vector<2x16xf32>,
    %213 = vector.extract_strided_slice %208 {offsets = [1, 0], sizes = [1, 16], strides = [1, 1]} : vector<14x32xf32> to vector<1x16xf32>
    %214 = vector.extract_strided_slice %208 {offsets = [1, 16], sizes = [1, 16], strides = [1, 1]} : vector<14x32xf32> to vector<1x16xf32>
    %215 = tpu.concatenate %213, %214 in 0 : vector<1x16xf32>, vector<1x16xf32> -> vector<2x16xf32>
    %c0_145 = arith.constant 0 : index
    %c16 = arith.constant 16 : index
    %216 = vector.load %arg16[%c0_145, %c16] : memref<2x256xf32, #tpu.memory_space<vmem>>, vector<2x16xf32>
    tpu.vector_store %arg16[%c0_145, %c16], %215 {strides = array<i32>} : memref<2x256xf32, #tpu.memory_space<vmem>>, vector<2x16xf32>,
    %217 = vector.extract_strided_slice %208 {offsets = [2, 0], sizes = [1, 16], strides = [1, 1]} : vector<14x32xf32> to vector<1x16xf32>
    %218 = vector.extract_strided_slice %208 {offsets = [2, 16], sizes = [1, 16], strides = [1, 1]} : vector<14x32xf32> to vector<1x16xf32>
    %219 = tpu.concatenate %217, %218 in 0 : vector<1x16xf32>, vector<1x16xf32> -> vector<2x16xf32>
    %c0_146 = arith.constant 0 : index
    %c32 = arith.constant 32 : index
    %220 = vector.load %arg16[%c0_146, %c32] : memref<2x256xf32, #tpu.memory_space<vmem>>, vector<2x16xf32>
    tpu.vector_store %arg16[%c0_146, %c32], %219 {strides = array<i32>} : memref<2x256xf32, #tpu.memory_space<vmem>>, vector<2x16xf32>,
    %221 = vector.extract_strided_slice %208 {offsets = [3, 0], sizes = [1, 16], strides = [1, 1]} : vector<14x32xf32> to vector<1x16xf32>
    %222 = vector.extract_strided_slice %208 {offsets = [3, 16], sizes = [1, 16], strides = [1, 1]} : vector<14x32xf32> to vector<1x16xf32>
    %223 = tpu.concatenate %221, %222 in 0 : vector<1x16xf32>, vector<1x16xf32> -> vector<2x16xf32>
    %c0_147 = arith.constant 0 : index
    %c48 = arith.constant 48 : index
    %224 = vector.load %arg16[%c0_147, %c48] : memref<2x256xf32, #tpu.memory_space<vmem>>, vector<2x16xf32>
    tpu.vector_store %arg16[%c0_147, %c48], %223 {strides = array<i32>} : memref<2x256xf32, #tpu.memory_space<vmem>>, vector<2x16xf32>,
    %225 = vector.extract_strided_slice %208 {offsets = [4, 0], sizes = [1, 16], strides = [1, 1]} : vector<14x32xf32> to vector<1x16xf32>
    %226 = vector.extract_strided_slice %208 {offsets = [4, 16], sizes = [1, 16], strides = [1, 1]} : vector<14x32xf32> to vector<1x16xf32>
    %227 = tpu.concatenate %225, %226 in 0 : vector<1x16xf32>, vector<1x16xf32> -> vector<2x16xf32>
    %c0_148 = arith.constant 0 : index
    %c64 = arith.constant 64 : index
    %228 = vector.load %arg16[%c0_148, %c64] : memref<2x256xf32, #tpu.memory_space<vmem>>, vector<2x16xf32>
    tpu.vector_store %arg16[%c0_148, %c64], %227 {strides = array<i32>} : memref<2x256xf32, #tpu.memory_space<vmem>>, vector<2x16xf32>,
    %229 = vector.extract_strided_slice %208 {offsets = [5, 0], sizes = [1, 16], strides = [1, 1]} : vector<14x32xf32> to vector<1x16xf32>
    %230 = vector.extract_strided_slice %208 {offsets = [5, 16], sizes = [1, 16], strides = [1, 1]} : vector<14x32xf32> to vector<1x16xf32>
    %231 = tpu.concatenate %229, %230 in 0 : vector<1x16xf32>, vector<1x16xf32> -> vector<2x16xf32>
    %c0_149 = arith.constant 0 : index
    %c80 = arith.constant 80 : index
    %232 = vector.load %arg16[%c0_149, %c80] : memref<2x256xf32, #tpu.memory_space<vmem>>, vector<2x16xf32>
    tpu.vector_store %arg16[%c0_149, %c80], %231 {strides = array<i32>} : memref<2x256xf32, #tpu.memory_space<vmem>>, vector<2x16xf32>,
    %233 = vector.extract_strided_slice %208 {offsets = [6, 0], sizes = [1, 16], strides = [1, 1]} : vector<14x32xf32> to vector<1x16xf32>
    %234 = vector.extract_strided_slice %208 {offsets = [6, 16], sizes = [1, 16], strides = [1, 1]} : vector<14x32xf32> to vector<1x16xf32>
    %235 = tpu.concatenate %233, %234 in 0 : vector<1x16xf32>, vector<1x16xf32> -> vector<2x16xf32>
    %c0_150 = arith.constant 0 : index
    %c96 = arith.constant 96 : index
    %236 = vector.load %arg16[%c0_150, %c96] : memref<2x256xf32, #tpu.memory_space<vmem>>, vector<2x16xf32>
    tpu.vector_store %arg16[%c0_150, %c96], %235 {strides = array<i32>} : memref<2x256xf32, #tpu.memory_space<vmem>>, vector<2x16xf32>,
    %237 = vector.extract_strided_slice %208 {offsets = [7, 0], sizes = [1, 16], strides = [1, 1]} : vector<14x32xf32> to vector<1x16xf32>
    %238 = vector.extract_strided_slice %208 {offsets = [7, 16], sizes = [1, 16], strides = [1, 1]} : vector<14x32xf32> to vector<1x16xf32>
    %239 = tpu.concatenate %237, %238 in 0 : vector<1x16xf32>, vector<1x16xf32> -> vector<2x16xf32>
    %c0_151 = arith.constant 0 : index
    %c112 = arith.constant 112 : index
    %240 = vector.load %arg16[%c0_151, %c112] : memref<2x256xf32, #tpu.memory_space<vmem>>, vector<2x16xf32>
    tpu.vector_store %arg16[%c0_151, %c112], %239 {strides = array<i32>} : memref<2x256xf32, #tpu.memory_space<vmem>>, vector<2x16xf32>,
    %241 = vector.extract_strided_slice %208 {offsets = [8, 0], sizes = [1, 16], strides = [1, 1]} : vector<14x32xf32> to vector<1x16xf32>
    %242 = vector.extract_strided_slice %208 {offsets = [8, 16], sizes = [1, 16], strides = [1, 1]} : vector<14x32xf32> to vector<1x16xf32>
    %243 = tpu.concatenate %241, %242 in 0 : vector<1x16xf32>, vector<1x16xf32> -> vector<2x16xf32>
    %c0_152 = arith.constant 0 : index
    %c128 = arith.constant 128 : index
    %244 = vector.load %arg16[%c0_152, %c128] : memref<2x256xf32, #tpu.memory_space<vmem>>, vector<2x16xf32>
    tpu.vector_store %arg16[%c0_152, %c128], %243 {strides = array<i32>} : memref<2x256xf32, #tpu.memory_space<vmem>>, vector<2x16xf32>,
    %245 = vector.extract_strided_slice %208 {offsets = [9, 0], sizes = [1, 16], strides = [1, 1]} : vector<14x32xf32> to vector<1x16xf32>
    %246 = vector.extract_strided_slice %208 {offsets = [9, 16], sizes = [1, 16], strides = [1, 1]} : vector<14x32xf32> to vector<1x16xf32>
    %247 = tpu.concatenate %245, %246 in 0 : vector<1x16xf32>, vector<1x16xf32> -> vector<2x16xf32>
    %c0_153 = arith.constant 0 : index
    %c144 = arith.constant 144 : index
    %248 = vector.load %arg16[%c0_153, %c144] : memref<2x256xf32, #tpu.memory_space<vmem>>, vector<2x16xf32>
    tpu.vector_store %arg16[%c0_153, %c144], %247 {strides = array<i32>} : memref<2x256xf32, #tpu.memory_space<vmem>>, vector<2x16xf32>,
    %249 = vector.extract_strided_slice %208 {offsets = [10, 0], sizes = [1, 16], strides = [1, 1]} : vector<14x32xf32> to vector<1x16xf32>
    %250 = vector.extract_strided_slice %208 {offsets = [10, 16], sizes = [1, 16], strides = [1, 1]} : vector<14x32xf32> to vector<1x16xf32>
    %251 = tpu.concatenate %249, %250 in 0 : vector<1x16xf32>, vector<1x16xf32> -> vector<2x16xf32>
    %c0_154 = arith.constant 0 : index
    %c160 = arith.constant 160 : index
    %252 = vector.load %arg16[%c0_154, %c160] : memref<2x256xf32, #tpu.memory_space<vmem>>, vector<2x16xf32>
    tpu.vector_store %arg16[%c0_154, %c160], %251 {strides = array<i32>} : memref<2x256xf32, #tpu.memory_space<vmem>>, vector<2x16xf32>,
    %253 = vector.extract_strided_slice %208 {offsets = [11, 0], sizes = [1, 16], strides = [1, 1]} : vector<14x32xf32> to vector<1x16xf32>
    %254 = vector.extract_strided_slice %208 {offsets = [11, 16], sizes = [1, 16], strides = [1, 1]} : vector<14x32xf32> to vector<1x16xf32>
    %255 = tpu.concatenate %253, %254 in 0 : vector<1x16xf32>, vector<1x16xf32> -> vector<2x16xf32>
    %c0_155 = arith.constant 0 : index
    %c176 = arith.constant 176 : index
    %256 = vector.load %arg16[%c0_155, %c176] : memref<2x256xf32, #tpu.memory_space<vmem>>, vector<2x16xf32>
    tpu.vector_store %arg16[%c0_155, %c176], %255 {strides = array<i32>} : memref<2x256xf32, #tpu.memory_space<vmem>>, vector<2x16xf32>,
    %257 = vector.extract_strided_slice %208 {offsets = [12, 0], sizes = [1, 16], strides = [1, 1]} : vector<14x32xf32> to vector<1x16xf32>
    %258 = vector.extract_strided_slice %208 {offsets = [12, 16], sizes = [1, 16], strides = [1, 1]} : vector<14x32xf32> to vector<1x16xf32>
    %259 = tpu.concatenate %257, %258 in 0 : vector<1x16xf32>, vector<1x16xf32> -> vector<2x16xf32>
    %c0_156 = arith.constant 0 : index
    %c192 = arith.constant 192 : index
    %260 = vector.load %arg16[%c0_156, %c192] : memref<2x256xf32, #tpu.memory_space<vmem>>, vector<2x16xf32>
    tpu.vector_store %arg16[%c0_156, %c192], %259 {strides = array<i32>} : memref<2x256xf32, #tpu.memory_space<vmem>>, vector<2x16xf32>,
    %261 = vector.extract_strided_slice %208 {offsets = [13, 0], sizes = [1, 16], strides = [1, 1]} : vector<14x32xf32> to vector<1x16xf32>
    %262 = vector.extract_strided_slice %208 {offsets = [13, 16], sizes = [1, 16], strides = [1, 1]} : vector<14x32xf32> to vector<1x16xf32>
    %263 = tpu.concatenate %261, %262 in 0 : vector<1x16xf32>, vector<1x16xf32> -> vector<2x16xf32>
    %c0_157 = arith.constant 0 : index
    %c208 = arith.constant 208 : index
    %264 = vector.load %arg16[%c0_157, %c208] : memref<2x256xf32, #tpu.memory_space<vmem>>, vector<2x16xf32>
    tpu.vector_store %arg16[%c0_157, %c208], %263 {strides = array<i32>} : memref<2x256xf32, #tpu.memory_space<vmem>>, vector<2x16xf32>,
    %c0_158 = arith.constant 0 : index
    %c0_159 = arith.constant 0 : index
    %265 = vector.load %arg16[%c0_158, %c0_159] : memref<2x256xf32, #tpu.memory_space<vmem>>, vector<2x256xf32>
    %c0_160 = arith.constant 0 : index
    %c0_161 = arith.constant 0 : index
    %266 = vector.load %arg12[%c0_160, %c0_161] : memref<256x256xf32, #tpu.memory_space<vmem>>, vector<256x256xf32>
    %cst_162 = arith.constant dense<0.000000e+00> : vector<2x256xf32>
    %267 = tpu.matmul %265, %266, %cst_162 {dimension_numbers = #tpu.dot_dimension_numbers<[1], [0], [0], [1], [0, 0, 1, 1], [], []>} : vector<2x256xf32>, vector<256x256xf32>, vector<2x256xf32> -> vector<2x256xf32>
    %c0_163 = arith.constant 0 : index
    %c0_164 = arith.constant 0 : index
    %268 = vector.load %arg13[%c0_163, %c0_164] : memref<1x256xf32, #tpu.memory_space<vmem>>, vector<1x256xf32>
    %269 = vector.broadcast %268 : vector<1x256xf32> to vector<2x256xf32>
    %270 = arith.addf %267, %269 : vector<2x256xf32>
    %cst_165 = arith.constant dense<0xFF800000> : vector<2xf32>
    %271 = vector.multi_reduction <maximumf>, %270, %cst_165 [1] : vector<2x256xf32> to vector<2xf32>
    %272 = vector.shape_cast %271 : vector<2xf32> to vector<2x1xf32>
    %273 = vector.broadcast %272 : vector<2x1xf32> to vector<2x256xf32>
    %274 = arith.subf %270, %273 : vector<2x256xf32>
    %275 = math.exp %274 : vector<2x256xf32>
    %cst_166 = arith.constant dense<0.000000e+00> : vector<2xf32>
    %276 = vector.multi_reduction <add>, %275, %cst_166 [1] : vector<2x256xf32> to vector<2xf32>
    %277 = vector.shape_cast %276 : vector<2xf32> to vector<2x1xf32>
    %278 = vector.broadcast %277 : vector<2x1xf32> to vector<2x256xf32>
    %279 = arith.divf %275, %278 : vector<2x256xf32>
    %c0_167 = arith.constant 0 : index
    %c0_168 = arith.constant 0 : index
    %280 = vector.load %arg14[%c0_167, %c0_168] : memref<2x256xf32, #tpu.memory_space<vmem>>, vector<2x256xf32>
    tpu.vector_store %arg14[%c0_167, %c0_168], %279 {strides = array<i32>} : memref<2x256xf32, #tpu.memory_space<vmem>>, vector<2x256xf32>,
    return
  }
}

</mosaic_0001>

<llo_original>
// kernel: tpu_custom_call.1
$region0: #{tpu_custom_call.1}
  #allocation0 [shape = 'u32[]', space=smem, size = 0x4, offset = 0x4, fixed_abs, tag = 'smem constant byte address 0x4 - core index']
  #allocation1 [shape = 'u32[72,128]{1,0:T(1,128)}', space=vmem, size = 0x9000, scoped, tag = 'internal scratch']
  #allocation2 [shape = 'f32[32,128]{1,0:T(8,128)}', space=vmem, size = 0x4000, scoped, tag = 'scratch operand']
  #allocation3 [shape = 'f32[2,256]{1,0:T(2,128)}', space=vmem, size = 0x800, scoped, tag = 'scratch operand']
  %s0 = inlined_call_operand.vmem [shape: f32[16,128], index: 0, kind: input, shape index: {}]
  %s1 = inlined_call_operand.vmem [shape: f32[3,128,128], index: 1, kind: input, shape index: {}]
  %s2 = inlined_call_operand.vmem [shape: f32[1,128], index: 2, kind: input, shape index: {}]
  %s3 = inlined_call_operand.hbm [shape: f32[3,128,128], index: 3, kind: input, shape index: {}]
  %s4 = inlined_call_operand.vmem [shape: f32[1,128], index: 4, kind: input, shape index: {}]
  %s5 = inlined_call_operand.hbm [shape: f32[3,128,128], index: 5, kind: input, shape index: {}]
  %s6 = inlined_call_operand.vmem [shape: f32[1,128], index: 6, kind: input, shape index: {}]
  %s7 = inlined_call_operand.hbm [shape: f32[3,128,128], index: 7, kind: input, shape index: {}]
  %s8 = inlined_call_operand.vmem [shape: f32[1,128], index: 8, kind: input, shape index: {}]
  %s9 = inlined_call_operand.vmem [shape: f32[3,128,32], index: 9, kind: input, shape index: {}]
  %s10 = inlined_call_operand.vmem [shape: f32[1,32], index: 10, kind: input, shape index: {}]
  %s11 = inlined_call_operand.hbm [shape: f32[128,128], index: 11, kind: input, shape index: {}]
  %s12 = inlined_call_operand.hbm [shape: f32[256,256], index: 12, kind: input, shape index: {}]
  %s13 = inlined_call_operand.vmem [shape: f32[1,256], index: 13, kind: input, shape index: {}]
  %s14 = inlined_call_operand.hbm [shape: f32[2,256], index: 14, kind: output, shape index: {}]
  %s15 = sld [smem:[#allocation0]]
  $region86: #{tpu_custom_call.1} parent=0
    _
  %s17 = ssub.s32 1, %s15
  %s18 = scalar_select 0, %s17, %s15
  $region1: #{tpu_custom_call.1} parent=0
    #allocation4 [shape = 'u8[196608]{0}', space=vmem, size = 0x30000, scoped, tag = 'input window, operand 3, single buffered']
    #allocation5 [shape = 's32[1]{0}', space=sflag, size = 0x4, scoped, tag = 'scoped memory for tpu_custom_call.1']
    #allocation6 [shape = 's32[1]{0}', space=sflag, size = 0x4, scoped, tag = 'scoped memory for tpu_custom_call.1']
    #allocation7 [shape = 'u8[196608]{0}', space=vmem, size = 0x30000, scoped, tag = 'input window, operand 5, single buffered']
    #allocation8 [shape = 's32[1]{0}', space=sflag, size = 0x4, scoped, tag = 'scoped memory for tpu_custom_call.1']
    #allocation9 [shape = 'u8[196608]{0}', space=vmem, size = 0x30000, scoped, tag = 'input window, operand 7, single buffered']
    #allocation10 [shape = 'u8[65536]{0}', space=vmem, size = 0x10000, scoped, tag = 'input window, operand 11, single buffered']
    #allocation11 [shape = 's32[1]{0}', space=sflag, size = 0x4, scoped, tag = 'scoped memory for tpu_custom_call.1']
    #allocation12 [shape = 'u8[262144]{0}', space=vmem, size = 0x40000, scoped, tag = 'input window, operand 12, single buffered']
    #allocation13 [shape = 'u8[2048]{0}', space=vmem, size = 0x800, scoped, tag = 'output window, operand 0, single buffered']
    %19 = vsyncpa [#allocation5], 0
    %20 = vsyncpa [#allocation8], 0
    %21 = vsyncpa [#allocation11], 0
    %22 = vsyncpa [#allocation6], 0
    // Predicated region
    $region2: #{tpu_custom_call.1} parent=1 // pred_check
      _
    $region3: #{tpu_custom_call.1} parent=1 // pred_check_branch
      %24 = sbr.rel (0) target = $region5
    $region4: #{tpu_custom_call.1} parent=1 // pred_region
      _
    $region5: #{tpu_custom_call.1} parent=1 // pred_fallthru
      _
    // Predicated region
    $region6: #{tpu_custom_call.1} parent=1 // pred_check
      _
    $region7: #{tpu_custom_call.1} parent=1 // pred_check_branch
      %26 = sbr.rel (0) target = $region9
    $region8: #{tpu_custom_call.1} parent=1 // pred_region
      _
    $region9: #{tpu_custom_call.1} parent=1 // pred_fallthru
      _
    // Predicated region
    $region10: #{tpu_custom_call.1} parent=1 // pred_check
      _
    $region11: #{tpu_custom_call.1} parent=1 // pred_check_branch
      %28 = sbr.rel (0) target = $region13
    $region12: #{tpu_custom_call.1} parent=1 // pred_region
      _
    $region13: #{tpu_custom_call.1} parent=1 // pred_fallthru
      _
    // Predicated region
    $region14: #{tpu_custom_call.1} parent=1 // pred_check
      _
    $region15: #{tpu_custom_call.1} parent=1 // pred_check_branch
      %30 = sbr.rel (0) target = $region17
    $region16: #{tpu_custom_call.1} parent=1 // pred_region
      %32 = vsyncadd [#allocation5], 0
      %s33 = sshll.u32 %s3, 4
      %s34 = int_to_ptr.hbm [resolvable:$true] %s33
      %s35 = sshll.u32 [#allocation4], 4
      %s36 = int_to_ptr.vmem [resolvable:$true] %s35
      %41 = dma.hbm_to_vmem [thread:$0]  %s34, 6144, %s36, [#allocation5], 128, 128, 8
    $region17: #{tpu_custom_call.1} parent=1 // pred_fallthru
      _
    // Predicated region
    $region18: #{tpu_custom_call.1} parent=1 // pred_check
      _
    $region19: #{tpu_custom_call.1} parent=1 // pred_check_branch
      %43 = sbr.rel (0) target = $region21
    $region20: #{tpu_custom_call.1} parent=1 // pred_region
      _
    $region21: #{tpu_custom_call.1} parent=1 // pred_fallthru
      _
    // Predicated region
    $region22: #{tpu_custom_call.1} parent=1 // pred_check
      _
    $region23: #{tpu_custom_call.1} parent=1 // pred_check_branch
      %45 = sbr.rel (0) target = $region25
    $region24: #{tpu_custom_call.1} parent=1 // pred_region
      %47 = vsyncadd [#allocation8], 0
      %s48 = sshll.u32 %s5, 4
      %s49 = int_to_ptr.hbm [resolvable:$true] %s48
      %s50 = sshll.u32 [#allocation7], 4
      %s51 = int_to_ptr.vmem [resolvable:$true] %s50
      %56 = dma.hbm_to_vmem [thread:$0]  %s49, 6144, %s51, [#allocation8], 128, 128, 8
    $region25: #{tpu_custom_call.1} parent=1 // pred_fallthru
      _
    // Predicated region
    $region26: #{tpu_custom_call.1} parent=1 // pred_check
      _
    $region27: #{tpu_custom_call.1} parent=1 // pred_check_branch
      %58 = sbr.rel (0) target = $region29
    $region28: #{tpu_custom_call.1} parent=1 // pred_region
      _
    $region29: #{tpu_custom_call.1} parent=1 // pred_fallthru
      _
    // Predicated region
    $region30: #{tpu_custom_call.1} parent=1 // pred_check
      _
    $region31: #{tpu_custom_call.1} parent=1 // pred_check_branch
      %60 = sbr.rel (0) target = $region33
    $region32: #{tpu_custom_call.1} parent=1 // pred_region
      %62 = vsyncadd [#allocation8], 0
      %s63 = sshll.u32 %s7, 4
      %s64 = int_to_ptr.hbm [resolvable:$true] %s63
      %s65 = sshll.u32 [#allocation9], 4
      %s66 = int_to_ptr.vmem [resolvable:$true] %s65
      %71 = dma.hbm_to_vmem [thread:$0]  %s64, 6144, %s66, [#allocation8], 128, 128, 8
    $region33: #{tpu_custom_call.1} parent=1 // pred_fallthru
      _
    // Predicated region
    $region34: #{tpu_custom_call.1} parent=1 // pred_check
      _
    $region35: #{tpu_custom_call.1} parent=1 // pred_check_branch
      %73 = sbr.rel (0) target = $region37
    $region36: #{tpu_custom_call.1} parent=1 // pred_region
      _
    $region37: #{tpu_custom_call.1} parent=1 // pred_fallthru
      _
    // Predicated region
    $region38: #{tpu_custom_call.1} parent=1 // pred_check
      _
    $region39: #{tpu_custom_call.1} parent=1 // pred_check_branch
      %75 = sbr.rel (0) target = $region41
    $region40: #{tpu_custom_call.1} parent=1 // pred_region
      _
    $region41: #{tpu_custom_call.1} parent=1 // pred_fallthru
      _
    // Predicated region
    $region42: #{tpu_custom_call.1} parent=1 // pred_check
      _
    $region43: #{tpu_custom_call.1} parent=1 // pred_check_branch
      %77 = sbr.rel (0) target = $region45
    $region44: #{tpu_custom_call.1} parent=1 // pred_region
      _
    $region45: #{tpu_custom_call.1} parent=1 // pred_fallthru
      _
    // Predicated region
    $region46: #{tpu_custom_call.1} parent=1 // pred_check
      _
    $region47: #{tpu_custom_call.1} parent=1 // pred_check_branch
      %79 = sbr.rel (0) target = $region49
    $region48: #{tpu_custom_call.1} parent=1 // pred_region
      %81 = vsyncadd [#allocation11], 0
      %s82 = sshll.u32 %s11, 4
      %s83 = int_to_ptr.hbm [resolvable:$true] %s82
      %s84 = sshll.u32 [#allocation10], 4
      %s85 = int_to_ptr.vmem [resolvable:$true] %s84
      %90 = dma.hbm_to_vmem [thread:$0]  %s83, 2048, %s85, [#allocation11], 128, 128, 8
    $region49: #{tpu_custom_call.1} parent=1 // pred_fallthru
      _
    // Predicated region
    $region50: #{tpu_custom_call.1} parent=1 // pred_check
      _
    $region51: #{tpu_custom_call.1} parent=1 // pred_check_branch
      %92 = sbr.rel (0) target = $region53
    $region52: #{tpu_custom_call.1} parent=1 // pred_region
      %94 = vsyncadd [#allocation11], 0
      %s95 = sshll.u32 %s12, 4
      %s96 = int_to_ptr.hbm [resolvable:$true] %s95
      %s97 = sshll.u32 [#allocation12], 4
      %s98 = int_to_ptr.vmem [resolvable:$true] %s97
      %103 = dma.hbm_to_vmem [thread:$0]  %s96, 8192, %s98, [#allocation11], 256, 256, 16
    $region53: #{tpu_custom_call.1} parent=1 // pred_fallthru
      _
    // Predicated region
    $region54: #{tpu_custom_call.1} parent=1 // pred_check
      _
    $region55: #{tpu_custom_call.1} parent=1 // pred_check_branch
      %105 = sbr.rel (0) target = $region57
    $region56: #{tpu_custom_call.1} parent=1 // pred_region
      _
    $region57: #{tpu_custom_call.1} parent=1 // pred_fallthru
      _
    // Predicated region
    $region58: #{tpu_custom_call.1} parent=1 // pred_check
      _
    $region59: #{tpu_custom_call.1} parent=1 // pred_check_branch
      %107 = sbr.rel (0) target = $region61
    $region60: #{tpu_custom_call.1} parent=1 // pred_region
      %109 = dma.done [#allocation5], 6144
    $region61: #{tpu_custom_call.1} parent=1 // pred_fallthru
      _
    // Predicated region
    $region62: #{tpu_custom_call.1} parent=1 // pred_check
      _
    $region63: #{tpu_custom_call.1} parent=1 // pred_check_branch
      %111 = sbr.rel (0) target = $region65
    $region64: #{tpu_custom_call.1} parent=1 // pred_region
      %113 = dma.done [#allocation8], 6144
    $region65: #{tpu_custom_call.1} parent=1 // pred_fallthru
      _
    // Predicated region
    $region66: #{tpu_custom_call.1} parent=1 // pred_check
      _
    $region67: #{tpu_custom_call.1} parent=1 // pred_check_branch
      %115 = sbr.rel (0) target = $region69
    $region68: #{tpu_custom_call.1} parent=1 // pred_region
      %117 = dma.done [#allocation8], 6144
    $region69: #{tpu_custom_call.1} parent=1 // pred_fallthru
      _
    // Predicated region
    $region70: #{tpu_custom_call.1} parent=1 // pred_check
      _
    $region71: #{tpu_custom_call.1} parent=1 // pred_check_branch
      %119 = sbr.rel (0) target = $region73
    $region72: #{tpu_custom_call.1} parent=1 // pred_region
      %121 = dma.done [#allocation11], 2048
    $region73: #{tpu_custom_call.1} parent=1 // pred_fallthru
      _
    // Predicated region
    $region74: #{tpu_custom_call.1} parent=1 // pred_check
      _
    $region75: #{tpu_custom_call.1} parent=1 // pred_check_branch
      %123 = sbr.rel (0) target = $region77
    $region76: #{tpu_custom_call.1} parent=1 // pred_region
      %125 = dma.done [#allocation11], 8192
    $region77: #{tpu_custom_call.1} parent=1 // pred_fallthru
      _
    %126 = vst [vmem:[#allocation2] sm:$0xff] 0.0
    %127 = vst [vmem:[#allocation2 + $0x18] sm:$0xff] 0.0
    %vm128 = vcmask 1042176
    %129 = vst.msk [vmem:[#allocation3 + $0x2] sm:$0x3] %vm128, 0.0
    %v130 = vld [vmem:[#allocation10] sm:$0xff]
    %v131 = vld [vmem:[#allocation10 + $0x8] sm:$0xff]
    %v132 = vld [vmem:[#allocation10 + $0x10] sm:$0xff]
    %v133 = vld [vmem:[#allocation10 + $0x18] sm:$0xff]
    %v134 = vld [vmem:[#allocation10 + $0x20] sm:$0xff]
    %v135 = vld [vmem:[#allocation10 + $0x28] sm:$0xff]
    %v136 = vld [vmem:[#allocation10 + $0x30] sm:$0xff]
    %v137 = vld [vmem:[#allocation10 + $0x38] sm:$0xff]
    %v138 = vld [vmem:[#allocation10 + $0x40] sm:$0xff]
    %v139 = vld [vmem:[#allocation10 + $0x48] sm:$0xff]
    %v140 = vld [vmem:[#allocation10 + $0x50] sm:$0xff]
    %v141 = vld [vmem:[#allocation10 + $0x58] sm:$0xff]
    %v142 = vld [vmem:[#allocation10 + $0x60] sm:$0xff]
    %v143 = vld [vmem:[#allocation10 + $0x68] sm:$0xff]
    %v144 = vld [vmem:[#allocation10 + $0x70] sm:$0xff]
    %v145 = vld [vmem:[#allocation10 + $0x78] sm:$0xff]
    %v146 = vld [vmem:[%s0] sm:$0xff]
    %v147 = vld [vmem:[%s0 + $0x8] sm:$0xff]
    %148 = vst [vmem:[#allocation2 + $0x8] sm:$0xff] %v146
    %149 = vst [vmem:[#allocation2 + $0x10] sm:$0xff] %v147
    %v150 = vld [vmem:[#allocation2 + $0x7] sm:$0xff]
    %v151 = vld [vmem:[#allocation2 + $0xf] sm:$0xff]
    %v152 = vld [vmem:[%s1] sm:$0xff]
    %v153 = vld [vmem:[%s1 + $0x8] sm:$0xff]
    %v154 = vld [vmem:[%s1 + $0x10] sm:$0xff]
    %v155 = vld [vmem:[%s1 + $0x18] sm:$0xff]
    %v156 = vld [vmem:[%s1 + $0x20] sm:$0xff]
    %v157 = vld [vmem:[%s1 + $0x28] sm:$0xff]
    %v158 = vld [vmem:[%s1 + $0x30] sm:$0xff]
    %v159 = vld [vmem:[%s1 + $0x38] sm:$0xff]
    %v160 = vld [vmem:[%s1 + $0x40] sm:$0xff]
    %v161 = vld [vmem:[%s1 + $0x48] sm:$0xff]
    %v162 = vld [vmem:[%s1 + $0x50] sm:$0xff]
    %v163 = vld [vmem:[%s1 + $0x58] sm:$0xff]
    %v164 = vld [vmem:[%s1 + $0x60] sm:$0xff]
    %v165 = vld [vmem:[%s1 + $0x68] sm:$0xff]
    %v166 = vld [vmem:[%s1 + $0x70] sm:$0xff]
    %v167 = vld [vmem:[%s1 + $0x78] sm:$0xff]
    %v168 = vld [vmem:[#allocation2 + $0x8] sm:$0xff]
    %v169 = vld [vmem:[#allocation2 + $0x10] sm:$0xff]
    %s170 = scalar_lea.vmem %s1, 128
    %v171 = vld [vmem:[%s170] sm:$0xff]
    %v172 = vld [vmem:[%s170 + $0x8] sm:$0xff]
    %v173 = vld [vmem:[%s170 + $0x10] sm:$0xff]
    %v174 = vld [vmem:[%s170 + $0x18] sm:$0xff]
    %v175 = vld [vmem:[%s170 + $0x20] sm:$0xff]
    %v176 = vld [vmem:[%s170 + $0x28] sm:$0xff]
    %v177 = vld [vmem:[%s170 + $0x30] sm:$0xff]
    %v178 = vld [vmem:[%s170 + $0x38] sm:$0xff]
    %v179 = vld [vmem:[%s170 + $0x40] sm:$0xff]
    %v180 = vld [vmem:[%s170 + $0x48] sm:$0xff]
    %v181 = vld [vmem:[%s170 + $0x50] sm:$0xff]
    %v182 = vld [vmem:[%s170 + $0x58] sm:$0xff]
    %v183 = vld [vmem:[%s170 + $0x60] sm:$0xff]
    %v184 = vld [vmem:[%s170 + $0x68] sm:$0xff]
    %v185 = vld [vmem:[%s170 + $0x70] sm:$0xff]
    %v186 = vld [vmem:[%s170 + $0x78] sm:$0xff]
    %187 = vmatpush.msra.mxu0 %v186
    %188 = vmatpush.msra.mxu0 %v185
    %189 = vmatpush.msra.mxu0 %v184
    %190 = vmatpush.msra.mxu0 %v183
    %191 = vmatpush.msra.mxu0 %v182
    %192 = vmatpush.msra.mxu0 %v181
    %193 = vmatpush.msra.mxu0 %v180
    %194 = vmatpush.msra.mxu0 %v179
    %195 = vmatpush.msra.mxu0 %v178
    %196 = vmatpush.msra.mxu0 %v177
    %197 = vmatpush.msra.mxu0 %v176
    %198 = vmatpush.msra.mxu0 %v175
    %199 = vmatpush.msra.mxu0 %v174
    %200 = vmatpush.msra.mxu0 %v173
    %201 = vmatpush.msra.mxu0 %v172
    %202 = vmatpush.msra.mxu0 %v171
    %203 = vmatmul.f32.gmra.mxu0 %v168
    %v204 = vpop.f32.mrf.mxu0
    %v205 = vadd.f32 0.0, %v204
    %206 = vmatmul.f32.gmra.mxu0 %v169
    %v207 = vpop.f32.mrf.mxu0
    %v208 = vadd.f32 0.0, %v207
    %209 = vdwg.mxu0
    %210 = vmatpush.msra.mxu0 %v167
    %211 = vmatpush.msra.mxu0 %v166
    %212 = vmatpush.msra.mxu0 %v165
    %213 = vmatpush.msra.mxu0 %v164
    %214 = vmatpush.msra.mxu0 %v163
    %215 = vmatpush.msra.mxu0 %v162
    %216 = vmatpush.msra.mxu0 %v161
    %217 = vmatpush.msra.mxu0 %v160
    %218 = vmatpush.msra.mxu0 %v159
    %219 = vmatpush.msra.mxu0 %v158
    %220 = vmatpush.msra.mxu0 %v157
    %221 = vmatpush.msra.mxu0 %v156
    %222 = vmatpush.msra.mxu0 %v155
    %223 = vmatpush.msra.mxu0 %v154
    %224 = vmatpush.msra.mxu0 %v153
    %225 = vmatpush.msra.mxu0 %v152
    %226 = vmatmul.f32.gmra.mxu0 %v150
    %v227 = vpop.f32.mrf.mxu0
    %v228 = vadd.f32 %v205, %v227
    %229 = vmatmul.f32.gmra.mxu0 %v151
    %v230 = vpop.f32.mrf.mxu0
    %v231 = vadd.f32 %v208, %v230
    %232 = vdwg.mxu0
    %v233 = vld [vmem:[#allocation2 + $0x9] sm:$0xff]
    %v234 = vld [vmem:[#allocation2 + $0x11] sm:$0xff]
    %s235 = scalar_lea.vmem %s1, 256
    %v236 = vld [vmem:[%s235] sm:$0xff]
    %v237 = vld [vmem:[%s235 + $0x8] sm:$0xff]
    %v238 = vld [vmem:[%s235 + $0x10] sm:$0xff]
    %v239 = vld [vmem:[%s235 + $0x18] sm:$0xff]
    %v240 = vld [vmem:[%s235 + $0x20] sm:$0xff]
    %v241 = vld [vmem:[%s235 + $0x28] sm:$0xff]
    %v242 = vld [vmem:[%s235 + $0x30] sm:$0xff]
    %v243 = vld [vmem:[%s235 + $0x38] sm:$0xff]
    %v244 = vld [vmem:[%s235 + $0x40] sm:$0xff]
    %v245 = vld [vmem:[%s235 + $0x48] sm:$0xff]
    %v246 = vld [vmem:[%s235 + $0x50] sm:$0xff]
    %v247 = vld [vmem:[%s235 + $0x58] sm:$0xff]
    %v248 = vld [vmem:[%s235 + $0x60] sm:$0xff]
    %v249 = vld [vmem:[%s235 + $0x68] sm:$0xff]
    %v250 = vld [vmem:[%s235 + $0x70] sm:$0xff]
    %v251 = vld [vmem:[%s235 + $0x78] sm:$0xff]
    %252 = vmatpush.msra.mxu0 %v251
    %253 = vmatpush.msra.mxu0 %v250
    %254 = vmatpush.msra.mxu0 %v249
    %255 = vmatpush.msra.mxu0 %v248
    %256 = vmatpush.msra.mxu0 %v247
    %257 = vmatpush.msra.mxu0 %v246
    %258 = vmatpush.msra.mxu0 %v245
    %259 = vmatpush.msra.mxu0 %v244
    %260 = vmatpush.msra.mxu0 %v243
    %261 = vmatpush.msra.mxu0 %v242
    %262 = vmatpush.msra.mxu0 %v241
    %263 = vmatpush.msra.mxu0 %v240
    %264 = vmatpush.msra.mxu0 %v239
    %265 = vmatpush.msra.mxu0 %v238
    %266 = vmatpush.msra.mxu0 %v237
    %267 = vmatpush.msra.mxu0 %v236
    %268 = vmatmul.f32.gmra.mxu0 %v233
    %v269 = vpop.f32.mrf.mxu0
    %v270 = vadd.f32 0.0, %v269
    %271 = vmatmul.f32.gmra.mxu0 %v234
    %v272 = vpop.f32.mrf.mxu0
    %v273 = vadd.f32 0.0, %v272
    %274 = vdwg.mxu0
    %v275 = vadd.f32 %v228, %v270
    %v276 = vadd.f32 %v231, %v273
    %v277 = vld [vmem:[%s2] sm:$0x1]
    %v279 = vperm.slane %v277, 0
    %v281 = vadd.f32 %v275, %v279
    %v282 = vadd.f32 %v276, %v279
    %v283 = vadd.f32 %v281, %v282
    %v284 = vrot.slane %v283, 4
    %v285 = vadd.f32 %v283, %v284
    %v286 = vrot.slane %v285, 2
    %v287 = vadd.f32 %v285, %v286
    %v288 = vrot.slane %v287, 1
    %v289 = vadd.f32 %v287, %v288
    %v290 = vmul.f32 %v281, %v281
    %v291 = vmul.f32 %v282, %v282
    %v292 = vadd.f32 %v290, %v291
    %v293 = vrot.slane %v292, 4
    %v294 = vadd.f32 %v292, %v293
    %v295 = vrot.slane %v294, 2
    %v296 = vadd.f32 %v294, %v295
    %v297 = vrot.slane %v296, 1
    %v298 = vadd.f32 %v296, %v297
    %vm299 = vcmask 1040384
    %v300 = vsel %vm299, %v289, %v298
    %301 = vmatpush.msra.mxu0 %v145
    %302 = vmatpush.msra.mxu0 %v144
    %303 = vmatpush.msra.mxu0 %v143
    %304 = vmatpush.msra.mxu0 %v142
    %305 = vmatpush.msra.mxu0 %v141
    %306 = vmatpush.msra.mxu0 %v140
    %307 = vmatpush.msra.mxu0 %v139
    %308 = vmatpush.msra.mxu0 %v138
    %309 = vmatpush.msra.mxu0 %v137
    %310 = vmatpush.msra.mxu0 %v136
    %311 = vmatpush.msra.mxu0 %v135
    %312 = vmatpush.msra.mxu0 %v134
    %313 = vmatpush.msra.mxu0 %v133
    %314 = vmatpush.msra.mxu0 %v132
    %315 = vmatpush.msra.mxu0 %v131
    %316 = vmatpush.msra.mxu0 %v130
    %317 = vmatmul.f32.gmra.mxu0 %v300
    %v318 = vpop.f32.mrf.mxu0
    %v319 = vadd.f32 0.0, %v318
    %320 = vdwg.mxu0
    %v321 = vmul.f32 %v319, 0.001953125
    %v322 = vmul.f32 %v321, %v321
    %v324 = vrot.slane %v322, 7
    %v326 = vsub.f32 %v321, %v324
    %v327 = vperm.slane %v321, 0
    %v328 = vsub.f32 %v281, %v327
    %v329 = vsub.f32 %v282, %v327
    %v330 = vadd.f32 %v326, 1e-05
    %v331 = vrsqrt.pop %v330
    %v332 = vmul.f32 %v331, %v330
    %v333 = vmul.f32 %v332, %v331
    %v334 = vmul.f32 0.5, %v333
    %v335 = vsub.f32 1.5, %v334
    %v336 = vmul.f32 %v331, %v335
    %vm337 = vweird.f32 %v330
    %vm338 = vweird.f32 %v331
    %vm339 = vmor %vm337, %vm338
    %v340 = vsel %vm339, %v331, %v336
    %v341 = vperm.slane %v340, 1
    %v342 = vmul.f32 %v328, %v341
    %v343 = vmul.f32 %v329, %v341
    %v344 = vmax.f32 %v342, 0.0
    %v345 = vmax.f32 %v343, 0.0
    %346 = vst [vmem:[#allocation2 + $0x8] sm:$0xff] %v344
    %347 = vst [vmem:[#allocation2 + $0x10] sm:$0xff] %v345
    %v348 = vld [vmem:[#allocation2 + $0x7] sm:$0xff]
    %v349 = vld [vmem:[#allocation2 + $0xf] sm:$0xff]
    %v350 = vld [vmem:[#allocation4] sm:$0xff]
    %v351 = vld [vmem:[#allocation4 + $0x8] sm:$0xff]
    %v352 = vld [vmem:[#allocation4 + $0x10] sm:$0xff]
    %v353 = vld [vmem:[#allocation4 + $0x18] sm:$0xff]
    %v354 = vld [vmem:[#allocation4 + $0x20] sm:$0xff]
    %v355 = vld [vmem:[#allocation4 + $0x28] sm:$0xff]
    %v356 = vld [vmem:[#allocation4 + $0x30] sm:$0xff]
    %v357 = vld [vmem:[#allocation4 + $0x38] sm:$0xff]
    %v358 = vld [vmem:[#allocation4 + $0x40] sm:$0xff]
    %v359 = vld [vmem:[#allocation4 + $0x48] sm:$0xff]
    %v360 = vld [vmem:[#allocation4 + $0x50] sm:$0xff]
    %v361 = vld [vmem:[#allocation4 + $0x58] sm:$0xff]
    %v362 = vld [vmem:[#allocation4 + $0x60] sm:$0xff]
    %v363 = vld [vmem:[#allocation4 + $0x68] sm:$0xff]
    %v364 = vld [vmem:[#allocation4 + $0x70] sm:$0xff]
    %v365 = vld [vmem:[#allocation4 + $0x78] sm:$0xff]
    %v366 = vld [vmem:[#allocation2 + $0x8] sm:$0xff]
    %v367 = vld [vmem:[#allocation2 + $0x10] sm:$0xff]
    %s368 = scalar_lea.vmem [#allocation4], 128
    %v369 = vld [vmem:[%s368] sm:$0xff]
    %v370 = vld [vmem:[%s368 + $0x8] sm:$0xff]
    %v371 = vld [vmem:[%s368 + $0x10] sm:$0xff]
    %v372 = vld [vmem:[%s368 + $0x18] sm:$0xff]
    %v373 = vld [vmem:[%s368 + $0x20] sm:$0xff]
    %v374 = vld [vmem:[%s368 + $0x28] sm:$0xff]
    %v375 = vld [vmem:[%s368 + $0x30] sm:$0xff]
    %v376 = vld [vmem:[%s368 + $0x38] sm:$0xff]
    %v377 = vld [vmem:[%s368 + $0x40] sm:$0xff]
    %v378 = vld [vmem:[%s368 + $0x48] sm:$0xff]
    %v379 = vld [vmem:[%s368 + $0x50] sm:$0xff]
    %v380 = vld [vmem:[%s368 + $0x58] sm:$0xff]
    %v381 = vld [vmem:[%s368 + $0x60] sm:$0xff]
    %v382 = vld [vmem:[%s368 + $0x68] sm:$0xff]
    %v383 = vld [vmem:[%s368 + $0x70] sm:$0xff]
    %v384 = vld [vmem:[%s368 + $0x78] sm:$0xff]
    %385 = vmatpush.msra.mxu0 %v384
    %386 = vmatpush.msra.mxu0 %v383
    %387 = vmatpush.msra.mxu0 %v382
    %388 = vmatpush.msra.mxu0 %v381
    %389 = vmatpush.msra.mxu0 %v380
    %390 = vmatpush.msra.mxu0 %v379
    %391 = vmatpush.msra.mxu0 %v378
    %392 = vmatpush.msra.mxu0 %v377
    %393 = vmatpush.msra.mxu0 %v376
    %394 = vmatpush.msra.mxu0 %v375
    %395 = vmatpush.msra.mxu0 %v374
    %396 = vmatpush.msra.mxu0 %v373
    %397 = vmatpush.msra.mxu0 %v372
    %398 = vmatpush.msra.mxu0 %v371
    %399 = vmatpush.msra.mxu0 %v370
    %400 = vmatpush.msra.mxu0 %v369
    %401 = vmatmul.f32.gmra.mxu0 %v366
    %v402 = vpop.f32.mrf.mxu0
    %v403 = vadd.f32 0.0, %v402
    %404 = vmatmul.f32.gmra.mxu0 %v367
    %v405 = vpop.f32.mrf.mxu0
    %v406 = vadd.f32 0.0, %v405
    %407 = vdwg.mxu0
    %408 = vmatpush.msra.mxu0 %v365
    %409 = vmatpush.msra.mxu0 %v364
    %410 = vmatpush.msra.mxu0 %v363
    %411 = vmatpush.msra.mxu0 %v362
    %412 = vmatpush.msra.mxu0 %v361
    %413 = vmatpush.msra.mxu0 %v360
    %414 = vmatpush.msra.mxu0 %v359
    %415 = vmatpush.msra.mxu0 %v358
    %416 = vmatpush.msra.mxu0 %v357
    %417 = vmatpush.msra.mxu0 %v356
    %418 = vmatpush.msra.mxu0 %v355
    %419 = vmatpush.msra.mxu0 %v354
    %420 = vmatpush.msra.mxu0 %v353
    %421 = vmatpush.msra.mxu0 %v352
    %422 = vmatpush.msra.mxu0 %v351
    %423 = vmatpush.msra.mxu0 %v350
    %424 = vmatmul.f32.gmra.mxu0 %v348
    %v425 = vpop.f32.mrf.mxu0
    %v426 = vadd.f32 %v403, %v425
    %427 = vmatmul.f32.gmra.mxu0 %v349
    %v428 = vpop.f32.mrf.mxu0
    %v429 = vadd.f32 %v406, %v428
    %430 = vdwg.mxu0
    %v431 = vld [vmem:[#allocation2 + $0x9] sm:$0xff]
    %v432 = vld [vmem:[#allocation2 + $0x11] sm:$0xff]
    %s433 = scalar_lea.vmem [#allocation4], 256
    %v434 = vld [vmem:[%s433] sm:$0xff]
    %v435 = vld [vmem:[%s433 + $0x8] sm:$0xff]
    %v436 = vld [vmem:[%s433 + $0x10] sm:$0xff]
    %v437 = vld [vmem:[%s433 + $0x18] sm:$0xff]
    %v438 = vld [vmem:[%s433 + $0x20] sm:$0xff]
    %v439 = vld [vmem:[%s433 + $0x28] sm:$0xff]
    %v440 = vld [vmem:[%s433 + $0x30] sm:$0xff]
    %v441 = vld [vmem:[%s433 + $0x38] sm:$0xff]
    %v442 = vld [vmem:[%s433 + $0x40] sm:$0xff]
    %v443 = vld [vmem:[%s433 + $0x48] sm:$0xff]
    %v444 = vld [vmem:[%s433 + $0x50] sm:$0xff]
    %v445 = vld [vmem:[%s433 + $0x58] sm:$0xff]
    %v446 = vld [vmem:[%s433 + $0x60] sm:$0xff]
    %v447 = vld [vmem:[%s433 + $0x68] sm:$0xff]
    %v448 = vld [vmem:[%s433 + $0x70] sm:$0xff]
    %v449 = vld [vmem:[%s433 + $0x78] sm:$0xff]
    %450 = vmatpush.msra.mxu0 %v449
    %451 = vmatpush.msra.mxu0 %v448
    %452 = vmatpush.msra.mxu0 %v447
    %453 = vmatpush.msra.mxu0 %v446
    %454 = vmatpush.msra.mxu0 %v445
    %455 = vmatpush.msra.mxu0 %v444
    %456 = vmatpush.msra.mxu0 %v443
    %457 = vmatpush.msra.mxu0 %v442
    %458 = vmatpush.msra.mxu0 %v441
    %459 = vmatpush.msra.mxu0 %v440
    %460 = vmatpush.msra.mxu0 %v439
    %461 = vmatpush.msra.mxu0 %v438
    %462 = vmatpush.msra.mxu0 %v437
    %463 = vmatpush.msra.mxu0 %v436
    %464 = vmatpush.msra.mxu0 %v435
    %465 = vmatpush.msra.mxu0 %v434
    %466 = vmatmul.f32.gmra.mxu0 %v431
    %v467 = vpop.f32.mrf.mxu0
    %v468 = vadd.f32 0.0, %v467
    %469 = vmatmul.f32.gmra.mxu0 %v432
    %v470 = vpop.f32.mrf.mxu0
    %v471 = vadd.f32 0.0, %v470
    %472 = vdwg.mxu0
    %v473 = vadd.f32 %v426, %v468
    %v474 = vadd.f32 %v429, %v471
    %v475 = vld [vmem:[%s4] sm:$0x1]
    %v477 = vperm.slane %v475, 0
    %v479 = vadd.f32 %v473, %v477
    %v480 = vadd.f32 %v474, %v477
    %v481 = vadd.f32 %v479, %v480
    %v482 = vrot.slane %v481, 4
    %v483 = vadd.f32 %v481, %v482
    %v484 = vrot.slane %v483, 2
    %v485 = vadd.f32 %v483, %v484
    %v486 = vrot.slane %v485, 1
    %v487 = vadd.f32 %v485, %v486
    %v488 = vmul.f32 %v479, %v479
    %v489 = vmul.f32 %v480, %v480
    %v490 = vadd.f32 %v488, %v489
    %v491 = vrot.slane %v490, 4
    %v492 = vadd.f32 %v490, %v491
    %v493 = vrot.slane %v492, 2
    %v494 = vadd.f32 %v492, %v493
    %v495 = vrot.slane %v494, 1
    %v496 = vadd.f32 %v494, %v495
    %v497 = vsel %vm299, %v487, %v496
    %498 = vmatpush.msra.mxu0 %v145
    %499 = vmatpush.msra.mxu0 %v144
    %500 = vmatpush.msra.mxu0 %v143
    %501 = vmatpush.msra.mxu0 %v142
    %502 = vmatpush.msra.mxu0 %v141
    %503 = vmatpush.msra.mxu0 %v140
    %504 = vmatpush.msra.mxu0 %v139
    %505 = vmatpush.msra.mxu0 %v138
    %506 = vmatpush.msra.mxu0 %v137
    %507 = vmatpush.msra.mxu0 %v136
    %508 = vmatpush.msra.mxu0 %v135
    %509 = vmatpush.msra.mxu0 %v134
    %510 = vmatpush.msra.mxu0 %v133
    %511 = vmatpush.msra.mxu0 %v132
    %512 = vmatpush.msra.mxu0 %v131
    %513 = vmatpush.msra.mxu0 %v130
    %514 = vmatmul.f32.gmra.mxu0 %v497
    %v515 = vpop.f32.mrf.mxu0
    %v516 = vadd.f32 0.0, %v515
    %517 = vdwg.mxu0
    %v518 = vmul.f32 %v516, 0.001953125
    %v519 = vmul.f32 %v518, %v518
    %v521 = vrot.slane %v519, 7
    %v523 = vsub.f32 %v518, %v521
    %v524 = vperm.slane %v518, 0
    %v525 = vsub.f32 %v479, %v524
    %v526 = vsub.f32 %v480, %v524
    %v527 = vadd.f32 %v523, 1e-05
    %v528 = vrsqrt.pop %v527
    %v529 = vmul.f32 %v528, %v527
    %v530 = vmul.f32 %v529, %v528
    %v531 = vmul.f32 0.5, %v530
    %v532 = vsub.f32 1.5, %v531
    %v533 = vmul.f32 %v528, %v532
    %vm534 = vweird.f32 %v527
    %vm535 = vweird.f32 %v528
    %vm536 = vmor %vm534, %vm535
    %v537 = vsel %vm536, %v528, %v533
    %v538 = vperm.slane %v537, 1
    %v539 = vmul.f32 %v525, %v538
    %v540 = vmul.f32 %v526, %v538
    %v541 = vadd.f32 %v539, %v146
    %v542 = vadd.f32 %v540, %v147
    %v543 = vmax.f32 %v541, 0.0
    %v544 = vmax.f32 %v542, 0.0
    %545 = vst [vmem:[#allocation2 + $0x8] sm:$0xff] %v543
    %546 = vst [vmem:[#allocation2 + $0x10] sm:$0xff] %v544
    %v547 = vld [vmem:[#allocation2 + $0x7] sm:$0xff]
    %v548 = vld [vmem:[#allocation2 + $0xf] sm:$0xff]
    %v549 = vld [vmem:[#allocation7] sm:$0xff]
    %v550 = vld [vmem:[#allocation7 + $0x8] sm:$0xff]
    %v551 = vld [vmem:[#allocation7 + $0x10] sm:$0xff]
    %v552 = vld [vmem:[#allocation7 + $0x18] sm:$0xff]
    %v553 = vld [vmem:[#allocation7 + $0x20] sm:$0xff]
    %v554 = vld [vmem:[#allocation7 + $0x28] sm:$0xff]
    %v555 = vld [vmem:[#allocation7 + $0x30] sm:$0xff]
    %v556 = vld [vmem:[#allocation7 + $0x38] sm:$0xff]
    %v557 = vld [vmem:[#allocation7 + $0x40] sm:$0xff]
    %v558 = vld [vmem:[#allocation7 + $0x48] sm:$0xff]
    %v559 = vld [vmem:[#allocation7 + $0x50] sm:$0xff]
    %v560 = vld [vmem:[#allocation7 + $0x58] sm:$0xff]
    %v561 = vld [vmem:[#allocation7 + $0x60] sm:$0xff]
    %v562 = vld [vmem:[#allocation7 + $0x68] sm:$0xff]
    %v563 = vld [vmem:[#allocation7 + $0x70] sm:$0xff]
    %v564 = vld [vmem:[#allocation7 + $0x78] sm:$0xff]
    %v565 = vld [vmem:[#allocation2 + $0x8] sm:$0xff]
    %v566 = vld [vmem:[#allocation2 + $0x10] sm:$0xff]
    %s567 = scalar_lea.vmem [#allocation7], 128
    %v568 = vld [vmem:[%s567] sm:$0xff]
    %v569 = vld [vmem:[%s567 + $0x8] sm:$0xff]
    %v570 = vld [vmem:[%s567 + $0x10] sm:$0xff]
    %v571 = vld [vmem:[%s567 + $0x18] sm:$0xff]
    %v572 = vld [vmem:[%s567 + $0x20] sm:$0xff]
    %v573 = vld [vmem:[%s567 + $0x28] sm:$0xff]
    %v574 = vld [vmem:[%s567 + $0x30] sm:$0xff]
    %v575 = vld [vmem:[%s567 + $0x38] sm:$0xff]
    %v576 = vld [vmem:[%s567 + $0x40] sm:$0xff]
    %v577 = vld [vmem:[%s567 + $0x48] sm:$0xff]
    %v578 = vld [vmem:[%s567 + $0x50] sm:$0xff]
    %v579 = vld [vmem:[%s567 + $0x58] sm:$0xff]
    %v580 = vld [vmem:[%s567 + $0x60] sm:$0xff]
    %v581 = vld [vmem:[%s567 + $0x68] sm:$0xff]
    %v582 = vld [vmem:[%s567 + $0x70] sm:$0xff]
    %v583 = vld [vmem:[%s567 + $0x78] sm:$0xff]
    %584 = vmatpush.msra.mxu0 %v583
    %585 = vmatpush.msra.mxu0 %v582
    %586 = vmatpush.msra.mxu0 %v581
    %587 = vmatpush.msra.mxu0 %v580
    %588 = vmatpush.msra.mxu0 %v579
    %589 = vmatpush.msra.mxu0 %v578
    %590 = vmatpush.msra.mxu0 %v577
    %591 = vmatpush.msra.mxu0 %v576
    %592 = vmatpush.msra.mxu0 %v575
    %593 = vmatpush.msra.mxu0 %v574
    %594 = vmatpush.msra.mxu0 %v573
    %595 = vmatpush.msra.mxu0 %v572
    %596 = vmatpush.msra.mxu0 %v571
    %597 = vmatpush.msra.mxu0 %v570
    %598 = vmatpush.msra.mxu0 %v569
    %599 = vmatpush.msra.mxu0 %v568
    %600 = vmatmul.f32.gmra.mxu0 %v565
    %v601 = vpop.f32.mrf.mxu0
    %v602 = vadd.f32 0.0, %v601
    %603 = vmatmul.f32.gmra.mxu0 %v566
    %v604 = vpop.f32.mrf.mxu0
    %v605 = vadd.f32 0.0, %v604
    %606 = vdwg.mxu0
    %607 = vmatpush.msra.mxu0 %v564
    %608 = vmatpush.msra.mxu0 %v563
    %609 = vmatpush.msra.mxu0 %v562
    %610 = vmatpush.msra.mxu0 %v561
    %611 = vmatpush.msra.mxu0 %v560
    %612 = vmatpush.msra.mxu0 %v559
    %613 = vmatpush.msra.mxu0 %v558
    %614 = vmatpush.msra.mxu0 %v557
    %615 = vmatpush.msra.mxu0 %v556
    %616 = vmatpush.msra.mxu0 %v555
    %617 = vmatpush.msra.mxu0 %v554
    %618 = vmatpush.msra.mxu0 %v553
    %619 = vmatpush.msra.mxu0 %v552
    %620 = vmatpush.msra.mxu0 %v551
    %621 = vmatpush.msra.mxu0 %v550
    %622 = vmatpush.msra.mxu0 %v549
    %623 = vmatmul.f32.gmra.mxu0 %v547
    %v624 = vpop.f32.mrf.mxu0
    %v625 = vadd.f32 %v602, %v624
    %626 = vmatmul.f32.gmra.mxu0 %v548
    %v627 = vpop.f32.mrf.mxu0
    %v628 = vadd.f32 %v605, %v627
    %629 = vdwg.mxu0
    %v630 = vld [vmem:[#allocation2 + $0x9] sm:$0xff]
    %v631 = vld [vmem:[#allocation2 + $0x11] sm:$0xff]
    %s632 = scalar_lea.vmem [#allocation7], 256
    %v633 = vld [vmem:[%s632] sm:$0xff]
    %v634 = vld [vmem:[%s632 + $0x8] sm:$0xff]
    %v635 = vld [vmem:[%s632 + $0x10] sm:$0xff]
    %v636 = vld [vmem:[%s632 + $0x18] sm:$0xff]
    %v637 = vld [vmem:[%s632 + $0x20] sm:$0xff]
    %v638 = vld [vmem:[%s632 + $0x28] sm:$0xff]
    %v639 = vld [vmem:[%s632 + $0x30] sm:$0xff]
    %v640 = vld [vmem:[%s632 + $0x38] sm:$0xff]
    %v641 = vld [vmem:[%s632 + $0x40] sm:$0xff]
    %v642 = vld [vmem:[%s632 + $0x48] sm:$0xff]
    %v643 = vld [vmem:[%s632 + $0x50] sm:$0xff]
    %v644 = vld [vmem:[%s632 + $0x58] sm:$0xff]
    %v645 = vld [vmem:[%s632 + $0x60] sm:$0xff]
    %v646 = vld [vmem:[%s632 + $0x68] sm:$0xff]
    %v647 = vld [vmem:[%s632 + $0x70] sm:$0xff]
    %v648 = vld [vmem:[%s632 + $0x78] sm:$0xff]
    %649 = vmatpush.msra.mxu0 %v648
    %650 = vmatpush.msra.mxu0 %v647
    %651 = vmatpush.msra.mxu0 %v646
    %652 = vmatpush.msra.mxu0 %v645
    %653 = vmatpush.msra.mxu0 %v644
    %654 = vmatpush.msra.mxu0 %v643
    %655 = vmatpush.msra.mxu0 %v642
    %656 = vmatpush.msra.mxu0 %v641
    %657 = vmatpush.msra.mxu0 %v640
    %658 = vmatpush.msra.mxu0 %v639
    %659 = vmatpush.msra.mxu0 %v638
    %660 = vmatpush.msra.mxu0 %v637
    %661 = vmatpush.msra.mxu0 %v636
    %662 = vmatpush.msra.mxu0 %v635
    %663 = vmatpush.msra.mxu0 %v634
    %664 = vmatpush.msra.mxu0 %v633
    %665 = vmatmul.f32.gmra.mxu0 %v630
    %v666 = vpop.f32.mrf.mxu0
    %v667 = vadd.f32 0.0, %v666
    %668 = vmatmul.f32.gmra.mxu0 %v631
    %v669 = vpop.f32.mrf.mxu0
    %v670 = vadd.f32 0.0, %v669
    %671 = vdwg.mxu0
    %v672 = vadd.f32 %v625, %v667
    %v673 = vadd.f32 %v628, %v670
    %v674 = vld [vmem:[%s6] sm:$0x1]
    %v676 = vperm.slane %v674, 0
    %v678 = vadd.f32 %v672, %v676
    %v679 = vadd.f32 %v673, %v676
    %v680 = vadd.f32 %v678, %v679
    %v681 = vrot.slane %v680, 4
    %v682 = vadd.f32 %v680, %v681
    %v683 = vrot.slane %v682, 2
    %v684 = vadd.f32 %v682, %v683
    %v685 = vrot.slane %v684, 1
    %v686 = vadd.f32 %v684, %v685
    %v687 = vmul.f32 %v678, %v678
    %v688 = vmul.f32 %v679, %v679
    %v689 = vadd.f32 %v687, %v688
    %v690 = vrot.slane %v689, 4
    %v691 = vadd.f32 %v689, %v690
    %v692 = vrot.slane %v691, 2
    %v693 = vadd.f32 %v691, %v692
    %v694 = vrot.slane %v693, 1
    %v695 = vadd.f32 %v693, %v694
    %v696 = vsel %vm299, %v686, %v695
    %697 = vmatpush.msra.mxu0 %v145
    %698 = vmatpush.msra.mxu0 %v144
    %699 = vmatpush.msra.mxu0 %v143
    %700 = vmatpush.msra.mxu0 %v142
    %701 = vmatpush.msra.mxu0 %v141
    %702 = vmatpush.msra.mxu0 %v140
    %703 = vmatpush.msra.mxu0 %v139
    %704 = vmatpush.msra.mxu0 %v138
    %705 = vmatpush.msra.mxu0 %v137
    %706 = vmatpush.msra.mxu0 %v136
    %707 = vmatpush.msra.mxu0 %v135
    %708 = vmatpush.msra.mxu0 %v134
    %709 = vmatpush.msra.mxu0 %v133
    %710 = vmatpush.msra.mxu0 %v132
    %711 = vmatpush.msra.mxu0 %v131
    %712 = vmatpush.msra.mxu0 %v130
    %713 = vmatmul.f32.gmra.mxu0 %v696
    %v714 = vpop.f32.mrf.mxu0
    %v715 = vadd.f32 0.0, %v714
    %716 = vdwg.mxu0
    %v717 = vmul.f32 %v715, 0.001953125
    %v718 = vmul.f32 %v717, %v717
    %v720 = vrot.slane %v718, 7
    %v722 = vsub.f32 %v717, %v720
    %v723 = vperm.slane %v717, 0
    %v724 = vsub.f32 %v678, %v723
    %v725 = vsub.f32 %v679, %v723
    %v726 = vadd.f32 %v722, 1e-05
    %v727 = vrsqrt.pop %v726
    %v728 = vmul.f32 %v727, %v726
    %v729 = vmul.f32 %v728, %v727
    %v730 = vmul.f32 0.5, %v729
    %v731 = vsub.f32 1.5, %v730
    %v732 = vmul.f32 %v727, %v731
    %vm733 = vweird.f32 %v726
    %vm734 = vweird.f32 %v727
    %vm735 = vmor %vm733, %vm734
    %v736 = vsel %vm735, %v727, %v732
    %v737 = vperm.slane %v736, 1
    %v738 = vmul.f32 %v724, %v737
    %v739 = vmul.f32 %v725, %v737
    %v740 = vmax.f32 %v738, 0.0
    %v741 = vmax.f32 %v739, 0.0
    %742 = vst [vmem:[#allocation2 + $0x8] sm:$0xff] %v740
    %743 = vst [vmem:[#allocation2 + $0x10] sm:$0xff] %v741
    %v744 = vld [vmem:[#allocation2 + $0x7] sm:$0xff]
    %v745 = vld [vmem:[#allocation2 + $0xf] sm:$0xff]
    %v746 = vld [vmem:[#allocation9] sm:$0xff]
    %v747 = vld [vmem:[#allocation9 + $0x8] sm:$0xff]
    %v748 = vld [vmem:[#allocation9 + $0x10] sm:$0xff]
    %v749 = vld [vmem:[#allocation9 + $0x18] sm:$0xff]
    %v750 = vld [vmem:[#allocation9 + $0x20] sm:$0xff]
    %v751 = vld [vmem:[#allocation9 + $0x28] sm:$0xff]
    %v752 = vld [vmem:[#allocation9 + $0x30] sm:$0xff]
    %v753 = vld [vmem:[#allocation9 + $0x38] sm:$0xff]
    %v754 = vld [vmem:[#allocation9 + $0x40] sm:$0xff]
    %v755 = vld [vmem:[#allocation9 + $0x48] sm:$0xff]
    %v756 = vld [vmem:[#allocation9 + $0x50] sm:$0xff]
    %v757 = vld [vmem:[#allocation9 + $0x58] sm:$0xff]
    %v758 = vld [vmem:[#allocation9 + $0x60] sm:$0xff]
    %v759 = vld [vmem:[#allocation9 + $0x68] sm:$0xff]
    %v760 = vld [vmem:[#allocation9 + $0x70] sm:$0xff]
    %v761 = vld [vmem:[#allocation9 + $0x78] sm:$0xff]
    %v762 = vld [vmem:[#allocation2 + $0x8] sm:$0xff]
    %v763 = vld [vmem:[#allocation2 + $0x10] sm:$0xff]
    %s764 = scalar_lea.vmem [#allocation9], 128
    %v765 = vld [vmem:[%s764] sm:$0xff]
    %v766 = vld [vmem:[%s764 + $0x8] sm:$0xff]
    %v767 = vld [vmem:[%s764 + $0x10] sm:$0xff]
    %v768 = vld [vmem:[%s764 + $0x18] sm:$0xff]
    %v769 = vld [vmem:[%s764 + $0x20] sm:$0xff]
    %v770 = vld [vmem:[%s764 + $0x28] sm:$0xff]
    %v771 = vld [vmem:[%s764 + $0x30] sm:$0xff]
    %v772 = vld [vmem:[%s764 + $0x38] sm:$0xff]
    %v773 = vld [vmem:[%s764 + $0x40] sm:$0xff]
    %v774 = vld [vmem:[%s764 + $0x48] sm:$0xff]
    %v775 = vld [vmem:[%s764 + $0x50] sm:$0xff]
    %v776 = vld [vmem:[%s764 + $0x58] sm:$0xff]
    %v777 = vld [vmem:[%s764 + $0x60] sm:$0xff]
    %v778 = vld [vmem:[%s764 + $0x68] sm:$0xff]
    %v779 = vld [vmem:[%s764 + $0x70] sm:$0xff]
    %v780 = vld [vmem:[%s764 + $0x78] sm:$0xff]
    %781 = vmatpush.msra.mxu0 %v780
    %782 = vmatpush.msra.mxu0 %v779
    %783 = vmatpush.msra.mxu0 %v778
    %784 = vmatpush.msra.mxu0 %v777
    %785 = vmatpush.msra.mxu0 %v776
    %786 = vmatpush.msra.mxu0 %v775
    %787 = vmatpush.msra.mxu0 %v774
    %788 = vmatpush.msra.mxu0 %v773
    %789 = vmatpush.msra.mxu0 %v772
    %790 = vmatpush.msra.mxu0 %v771
    %791 = vmatpush.msra.mxu0 %v770
    %792 = vmatpush.msra.mxu0 %v769
    %793 = vmatpush.msra.mxu0 %v768
    %794 = vmatpush.msra.mxu0 %v767
    %795 = vmatpush.msra.mxu0 %v766
    %796 = vmatpush.msra.mxu0 %v765
    %797 = vmatmul.f32.gmra.mxu0 %v762
    %v798 = vpop.f32.mrf.mxu0
    %v799 = vadd.f32 0.0, %v798
    %800 = vmatmul.f32.gmra.mxu0 %v763
    %v801 = vpop.f32.mrf.mxu0
    %v802 = vadd.f32 0.0, %v801
    %803 = vdwg.mxu0
    %804 = vmatpush.msra.mxu0 %v761
    %805 = vmatpush.msra.mxu0 %v760
    %806 = vmatpush.msra.mxu0 %v759
    %807 = vmatpush.msra.mxu0 %v758
    %808 = vmatpush.msra.mxu0 %v757
    %809 = vmatpush.msra.mxu0 %v756
    %810 = vmatpush.msra.mxu0 %v755
    %811 = vmatpush.msra.mxu0 %v754
    %812 = vmatpush.msra.mxu0 %v753
    %813 = vmatpush.msra.mxu0 %v752
    %814 = vmatpush.msra.mxu0 %v751
    %815 = vmatpush.msra.mxu0 %v750
    %816 = vmatpush.msra.mxu0 %v749
    %817 = vmatpush.msra.mxu0 %v748
    %818 = vmatpush.msra.mxu0 %v747
    %819 = vmatpush.msra.mxu0 %v746
    %820 = vmatmul.f32.gmra.mxu0 %v744
    %v821 = vpop.f32.mrf.mxu0
    %v822 = vadd.f32 %v799, %v821
    %823 = vmatmul.f32.gmra.mxu0 %v745
    %v824 = vpop.f32.mrf.mxu0
    %v825 = vadd.f32 %v802, %v824
    %826 = vdwg.mxu0
    %v827 = vld [vmem:[#allocation2 + $0x9] sm:$0xff]
    %v828 = vld [vmem:[#allocation2 + $0x11] sm:$0xff]
    %s829 = scalar_lea.vmem [#allocation9], 256
    %v830 = vld [vmem:[%s829] sm:$0xff]
    %v831 = vld [vmem:[%s829 + $0x8] sm:$0xff]
    %v832 = vld [vmem:[%s829 + $0x10] sm:$0xff]
    %v833 = vld [vmem:[%s829 + $0x18] sm:$0xff]
    %v834 = vld [vmem:[%s829 + $0x20] sm:$0xff]
    %v835 = vld [vmem:[%s829 + $0x28] sm:$0xff]
    %v836 = vld [vmem:[%s829 + $0x30] sm:$0xff]
    %v837 = vld [vmem:[%s829 + $0x38] sm:$0xff]
    %v838 = vld [vmem:[%s829 + $0x40] sm:$0xff]
    %v839 = vld [vmem:[%s829 + $0x48] sm:$0xff]
    %v840 = vld [vmem:[%s829 + $0x50] sm:$0xff]
    %v841 = vld [vmem:[%s829 + $0x58] sm:$0xff]
    %v842 = vld [vmem:[%s829 + $0x60] sm:$0xff]
    %v843 = vld [vmem:[%s829 + $0x68] sm:$0xff]
    %v844 = vld [vmem:[%s829 + $0x70] sm:$0xff]
    %v845 = vld [vmem:[%s829 + $0x78] sm:$0xff]
    %846 = vmatpush.msra.mxu0 %v845
    %847 = vmatpush.msra.mxu0 %v844
    %848 = vmatpush.msra.mxu0 %v843
    %849 = vmatpush.msra.mxu0 %v842
    %850 = vmatpush.msra.mxu0 %v841
    %851 = vmatpush.msra.mxu0 %v840
    %852 = vmatpush.msra.mxu0 %v839
    %853 = vmatpush.msra.mxu0 %v838
    %854 = vmatpush.msra.mxu0 %v837
    %855 = vmatpush.msra.mxu0 %v836
    %856 = vmatpush.msra.mxu0 %v835
    %857 = vmatpush.msra.mxu0 %v834
    %858 = vmatpush.msra.mxu0 %v833
    %859 = vmatpush.msra.mxu0 %v832
    %860 = vmatpush.msra.mxu0 %v831
    %861 = vmatpush.msra.mxu0 %v830
    %862 = vmatmul.f32.gmra.mxu0 %v827
    %v863 = vpop.f32.mrf.mxu0
    %v864 = vadd.f32 0.0, %v863
    %865 = vmatmul.f32.gmra.mxu0 %v828
    %v866 = vpop.f32.mrf.mxu0
    %v867 = vadd.f32 0.0, %v866
    %868 = vdwg.mxu0
    %v869 = vadd.f32 %v822, %v864
    %v870 = vadd.f32 %v825, %v867
    %v871 = vld [vmem:[%s8] sm:$0x1]
    %v873 = vperm.slane %v871, 0
    %v875 = vadd.f32 %v869, %v873
    %v876 = vadd.f32 %v870, %v873
    %v877 = vadd.f32 %v875, %v876
    %v878 = vrot.slane %v877, 4
    %v879 = vadd.f32 %v877, %v878
    %v880 = vrot.slane %v879, 2
    %v881 = vadd.f32 %v879, %v880
    %v882 = vrot.slane %v881, 1
    %v883 = vadd.f32 %v881, %v882
    %v884 = vmul.f32 %v875, %v875
    %v885 = vmul.f32 %v876, %v876
    %v886 = vadd.f32 %v884, %v885
    %v887 = vrot.slane %v886, 4
    %v888 = vadd.f32 %v886, %v887
    %v889 = vrot.slane %v888, 2
    %v890 = vadd.f32 %v888, %v889
    %v891 = vrot.slane %v890, 1
    %v892 = vadd.f32 %v890, %v891
    %v893 = vsel %vm299, %v883, %v892
    %894 = vmatpush.msra.mxu0 %v145
    %895 = vmatpush.msra.mxu0 %v144
    %896 = vmatpush.msra.mxu0 %v143
    %897 = vmatpush.msra.mxu0 %v142
    %898 = vmatpush.msra.mxu0 %v141
    %899 = vmatpush.msra.mxu0 %v140
    %900 = vmatpush.msra.mxu0 %v139
    %901 = vmatpush.msra.mxu0 %v138
    %902 = vmatpush.msra.mxu0 %v137
    %903 = vmatpush.msra.mxu0 %v136
    %904 = vmatpush.msra.mxu0 %v135
    %905 = vmatpush.msra.mxu0 %v134
    %906 = vmatpush.msra.mxu0 %v133
    %907 = vmatpush.msra.mxu0 %v132
    %908 = vmatpush.msra.mxu0 %v131
    %909 = vmatpush.msra.mxu0 %v130
    %910 = vmatmul.f32.gmra.mxu0 %v893
    %v911 = vpop.f32.mrf.mxu0
    %v912 = vadd.f32 0.0, %v911
    %913 = vdwg.mxu0
    %v914 = vmul.f32 %v912, 0.001953125
    %v915 = vmul.f32 %v914, %v914
    %v917 = vrot.slane %v915, 7
    %v919 = vsub.f32 %v914, %v917
    %v920 = vperm.slane %v914, 0
    %v921 = vsub.f32 %v875, %v920
    %v922 = vsub.f32 %v876, %v920
    %v923 = vadd.f32 %v919, 1e-05
    %v924 = vrsqrt.pop %v923
    %v925 = vmul.f32 %v924, %v923
    %v926 = vmul.f32 %v925, %v924
    %v927 = vmul.f32 0.5, %v926
    %v928 = vsub.f32 1.5, %v927
    %v929 = vmul.f32 %v924, %v928
    %vm930 = vweird.f32 %v923
    %vm931 = vweird.f32 %v924
    %vm932 = vmor %vm930, %vm931
    %v933 = vsel %vm932, %v924, %v929
    %v934 = vperm.slane %v933, 1
    %v935 = vmul.f32 %v921, %v934
    %v936 = vmul.f32 %v922, %v934
    %v937 = vadd.f32 %v935, %v543
    %v938 = vadd.f32 %v936, %v544
    %v939 = vmax.f32 %v937, 0.0
    %v940 = vmax.f32 %v938, 0.0
    %941 = vst [vmem:[#allocation2 + $0x8] sm:$0xff] %v939
    %942 = vst [vmem:[#allocation2 + $0x10] sm:$0xff] %v940
    %v943 = vld [vmem:[#allocation2 + $0x8] sm:$0xff]
    %v944 = vld [vmem:[#allocation2 + $0x10] sm:$0x3f]
    %v945 = vld [vmem:[%s9] sm:$0xff]
    %v946 = vld [vmem:[%s9 + $0x8] sm:$0xff]
    %v947 = vld [vmem:[%s9 + $0x10] sm:$0xff]
    %v948 = vld [vmem:[%s9 + $0x18] sm:$0xff]
    %v949 = vld [vmem:[%s9 + $0x20] sm:$0xff]
    %v950 = vld [vmem:[%s9 + $0x28] sm:$0xff]
    %v951 = vld [vmem:[%s9 + $0x30] sm:$0xff]
    %v952 = vld [vmem:[%s9 + $0x38] sm:$0xff]
    %v953 = vld [vmem:[%s9 + $0x40] sm:$0xff]
    %v954 = vld [vmem:[%s9 + $0x48] sm:$0xff]
    %v955 = vld [vmem:[%s9 + $0x50] sm:$0xff]
    %v956 = vld [vmem:[%s9 + $0x58] sm:$0xff]
    %v957 = vld [vmem:[%s9 + $0x60] sm:$0xff]
    %v958 = vld [vmem:[%s9 + $0x68] sm:$0xff]
    %v959 = vld [vmem:[%s9 + $0x70] sm:$0xff]
    %v960 = vld [vmem:[%s9 + $0x78] sm:$0xff]
    %v961 = vld [vmem:[#allocation2 + $0x9] sm:$0xff]
    %v962 = vld [vmem:[#allocation2 + $0x11] sm:$0x3f]
    %s963 = scalar_lea.vmem %s9, 128
    %v964 = vld [vmem:[%s963] sm:$0xff]
    %v965 = vld [vmem:[%s963 + $0x8] sm:$0xff]
    %v966 = vld [vmem:[%s963 + $0x10] sm:$0xff]
    %v967 = vld [vmem:[%s963 + $0x18] sm:$0xff]
    %v968 = vld [vmem:[%s963 + $0x20] sm:$0xff]
    %v969 = vld [vmem:[%s963 + $0x28] sm:$0xff]
    %v970 = vld [vmem:[%s963 + $0x30] sm:$0xff]
    %v971 = vld [vmem:[%s963 + $0x38] sm:$0xff]
    %v972 = vld [vmem:[%s963 + $0x40] sm:$0xff]
    %v973 = vld [vmem:[%s963 + $0x48] sm:$0xff]
    %v974 = vld [vmem:[%s963 + $0x50] sm:$0xff]
    %v975 = vld [vmem:[%s963 + $0x58] sm:$0xff]
    %v976 = vld [vmem:[%s963 + $0x60] sm:$0xff]
    %v977 = vld [vmem:[%s963 + $0x68] sm:$0xff]
    %v978 = vld [vmem:[%s963 + $0x70] sm:$0xff]
    %v979 = vld [vmem:[%s963 + $0x78] sm:$0xff]
    %980 = vmatpush.msra.mxu0 %v979
    %981 = vmatpush.msra.mxu0 %v978
    %982 = vmatpush.msra.mxu0 %v977
    %983 = vmatpush.msra.mxu0 %v976
    %984 = vmatpush.msra.mxu0 %v975
    %985 = vmatpush.msra.mxu0 %v974
    %986 = vmatpush.msra.mxu0 %v973
    %987 = vmatpush.msra.mxu0 %v972
    %988 = vmatpush.msra.mxu0 %v971
    %989 = vmatpush.msra.mxu0 %v970
    %990 = vmatpush.msra.mxu0 %v969
    %991 = vmatpush.msra.mxu0 %v968
    %992 = vmatpush.msra.mxu0 %v967
    %993 = vmatpush.msra.mxu0 %v966
    %994 = vmatpush.msra.mxu0 %v965
    %995 = vmatpush.msra.mxu0 %v964
    %996 = vmatmul.f32.gmra.mxu0 %v961
    %v997 = vpop.f32.mrf.mxu0
    %v998 = vadd.f32 0.0, %v997
    %999 = vmatmul.f32.gmra.mxu0 %v962
    %v1000 = vpop.f32.mrf.mxu0
    %v1001 = vadd.f32 0.0, %v1000
    %1002 = vdwg.mxu0
    %1003 = vmatpush.msra.mxu0 %v960
    %1004 = vmatpush.msra.mxu0 %v959
    %1005 = vmatpush.msra.mxu0 %v958
    %1006 = vmatpush.msra.mxu0 %v957
    %1007 = vmatpush.msra.mxu0 %v956
    %1008 = vmatpush.msra.mxu0 %v955
    %1009 = vmatpush.msra.mxu0 %v954
    %1010 = vmatpush.msra.mxu0 %v953
    %1011 = vmatpush.msra.mxu0 %v952
    %1012 = vmatpush.msra.mxu0 %v951
    %1013 = vmatpush.msra.mxu0 %v950
    %1014 = vmatpush.msra.mxu0 %v949
    %1015 = vmatpush.msra.mxu0 %v948
    %1016 = vmatpush.msra.mxu0 %v947
    %1017 = vmatpush.msra.mxu0 %v946
    %1018 = vmatpush.msra.mxu0 %v945
    %1019 = vmatmul.f32.gmra.mxu0 %v943
    %v1020 = vpop.f32.mrf.mxu0
    %v1021 = vadd.f32 %v998, %v1020
    %1022 = vmatmul.f32.gmra.mxu0 %v944
    %v1023 = vpop.f32.mrf.mxu0
    %v1024 = vadd.f32 %v1001, %v1023
    %1025 = vdwg.mxu0
    %v1026 = vld [vmem:[#allocation2 + $0xa] sm:$0xff]
    %v1027 = vld [vmem:[#allocation2 + $0x12] sm:$0x3f]
    %s1028 = scalar_lea.vmem %s9, 256
    %v1029 = vld [vmem:[%s1028] sm:$0xff]
    %v1030 = vld [vmem:[%s1028 + $0x8] sm:$0xff]
    %v1031 = vld [vmem:[%s1028 + $0x10] sm:$0xff]
    %v1032 = vld [vmem:[%s1028 + $0x18] sm:$0xff]
    %v1033 = vld [vmem:[%s1028 + $0x20] sm:$0xff]
    %v1034 = vld [vmem:[%s1028 + $0x28] sm:$0xff]
    %v1035 = vld [vmem:[%s1028 + $0x30] sm:$0xff]
    %v1036 = vld [vmem:[%s1028 + $0x38] sm:$0xff]
    %v1037 = vld [vmem:[%s1028 + $0x40] sm:$0xff]
    %v1038 = vld [vmem:[%s1028 + $0x48] sm:$0xff]
    %v1039 = vld [vmem:[%s1028 + $0x50] sm:$0xff]
    %v1040 = vld [vmem:[%s1028 + $0x58] sm:$0xff]
    %v1041 = vld [vmem:[%s1028 + $0x60] sm:$0xff]
    %v1042 = vld [vmem:[%s1028 + $0x68] sm:$0xff]
    %v1043 = vld [vmem:[%s1028 + $0x70] sm:$0xff]
    %v1044 = vld [vmem:[%s1028 + $0x78] sm:$0xff]
    %1045 = vmatpush.msra.mxu0 %v1044
    %1046 = vmatpush.msra.mxu0 %v1043
    %1047 = vmatpush.msra.mxu0 %v1042
    %1048 = vmatpush.msra.mxu0 %v1041
    %1049 = vmatpush.msra.mxu0 %v1040
    %1050 = vmatpush.msra.mxu0 %v1039
    %1051 = vmatpush.msra.mxu0 %v1038
    %1052 = vmatpush.msra.mxu0 %v1037
    %1053 = vmatpush.msra.mxu0 %v1036
    %1054 = vmatpush.msra.mxu0 %v1035
    %1055 = vmatpush.msra.mxu0 %v1034
    %1056 = vmatpush.msra.mxu0 %v1033
    %1057 = vmatpush.msra.mxu0 %v1032
    %1058 = vmatpush.msra.mxu0 %v1031
    %1059 = vmatpush.msra.mxu0 %v1030
    %1060 = vmatpush.msra.mxu0 %v1029
    %1061 = vmatmul.f32.gmra.mxu0 %v1026
    %v1062 = vpop.f32.mrf.mxu0
    %v1063 = vadd.f32 0.0, %v1062
    %1064 = vmatmul.f32.gmra.mxu0 %v1027
    %v1065 = vpop.f32.mrf.mxu0
    %v1066 = vadd.f32 0.0, %v1065
    %1067 = vdwg.mxu0
    %v1068 = vadd.f32 %v1021, %v1063
    %v1069 = vadd.f32 %v1024, %v1066
    %v1070 = vld [vmem:[%s10] sm:$0x1]
    %v1072 = vperm.slane %v1070, 0
    %v1074 = vadd.f32 %v1068, %v1072
    %v1075 = vadd.f32 %v1069, %v1072
    %vm1076 = vcmask 261120
    %v1077 = vsel %vm1076, %v1074, 0.0
    %vm1078 = vcmask 259072
    %v1079 = vsel %vm1078, %v1075, 0.0
    %v1080 = vadd.f32 %v1077, %v1079
    %1081 = vadd.xlane.f32.xlu0 %v1080
    %v1082 = vpop.xlane.xlu0 %1081
    %v1083 = vrot.slane %v1082, 4
    %v1084 = vadd.f32 %v1082, %v1083
    %v1085 = vrot.slane %v1084, 2
    %v1086 = vadd.f32 %v1084, %v1085
    %v1087 = vrot.slane %v1086, 1
    %v1088 = vadd.f32 %v1086, %v1087
    %s1089 = vtos %v1088
    %s1090 = smul.f32 %s1089, 0.0025510204
    %v1091 = vmul.f32 %v1074, %v1074
    %v1092 = vmul.f32 %v1075, %v1075
    %v1093 = vsel %vm1076, %v1091, 0.0
    %v1094 = vsel %vm1078, %v1092, 0.0
    %v1095 = vadd.f32 %v1093, %v1094
    %1096 = vadd.xlane.f32.xlu0 %v1095
    %v1097 = vpop.xlane.xlu0 %1096
    %v1098 = vrot.slane %v1097, 4
    %v1099 = vadd.f32 %v1097, %v1098
    %v1100 = vrot.slane %v1099, 2
    %v1101 = vadd.f32 %v1099, %v1100
    %v1102 = vrot.slane %v1101, 1
    %v1103 = vadd.f32 %v1101, %v1102
    %s1104 = vtos %v1103
    %s1105 = smul.f32 %s1104, 0.0025510204
    %s1106 = smul.f32 %s1090, %s1090
    %s1107 = ssub.f32 %s1105, %s1106
    %v1108 = vstv %s1090
    %v1109 = vsub.f32 %v1074, %v1108
    %v1110 = vsub.f32 %v1075, %v1108
    %s1111 = sadd.f32 %s1107, 1e-05
    %v1112 = vstv %s1111
    %v1113 = vrsqrt.pop %v1112
    %v1114 = vmul.f32 %v1113, %v1112
    %v1115 = vmul.f32 %v1114, %v1113
    %v1116 = vmul.f32 0.5, %v1115
    %v1117 = vsub.f32 1.5, %v1116
    %v1118 = vmul.f32 %v1113, %v1117
    %vm1119 = vweird.f32 %v1112
    %vm1120 = vweird.f32 %v1113
    %vm1121 = vmor %vm1119, %vm1120
    %v1122 = vsel %vm1121, %v1113, %v1118
    %s1123 = vtos %v1122
    %v1124 = vstv %s1123
    %v1125 = vmul.f32 %v1109, %v1124
    %v1126 = vmul.f32 %v1110, %v1124
    %v1127 = vmax.f32 %v1125, 0.0
    %v1128 = vmax.f32 %v1126, 0.0
    %v1130 = vrot.slane %v1127, 7
    %1131 = vrot.lane.b32.xlu0 %v1130, 112
    %v1132 = vpop.permute.xlu0 %1131
    %v1134 = vsel %vm299, %v1127, %v1132
    %vm1135 = vcmask 123904
    %1136 = vst.msk [vmem:[#allocation3] sm:$0x3] %vm1135, %v1134
    %v1137 = vrot.slane %v1127, 1
    %1139 = vrot.lane.b32.xlu0 %v1127, 112
    %v1140 = vpop.permute.xlu0 %1139
    %v1142 = vsel %vm299, %v1137, %v1140
    %1144 = vrot.lane.b32.xlu0 %v1142, 16
    %v1145 = vpop.permute.xlu0 %1144
    %vm1147 = vcmask 255104
    %1148 = vst.msk [vmem:[#allocation3] sm:$0x3] %vm1147, %v1145
    %v1149 = vrot.slane %v1127, 2
    %1151 = vrot.lane.b32.xlu0 %v1137, 112
    %v1152 = vpop.permute.xlu0 %1151
    %v1154 = vsel %vm299, %v1149, %v1152
    %1156 = vrot.lane.b32.xlu0 %v1154, 32
    %v1157 = vpop.permute.xlu0 %1156
    %vm1159 = vcmask 386304
    %1160 = vst.msk [vmem:[#allocation3] sm:$0x3] %vm1159, %v1157
    %v1161 = vrot.slane %v1127, 3
    %1163 = vrot.lane.b32.xlu0 %v1149, 112
    %v1164 = vpop.permute.xlu0 %1163
    %v1166 = vsel %vm299, %v1161, %v1164
    %1168 = vrot.lane.b32.xlu0 %v1166, 48
    %v1169 = vpop.permute.xlu0 %1168
    %vm1171 = vcmask 517504
    %1172 = vst.msk [vmem:[#allocation3] sm:$0x3] %vm1171, %v1169
    %v1173 = vrot.slane %v1127, 4
    %1175 = vrot.lane.b32.xlu0 %v1161, 112
    %v1176 = vpop.permute.xlu0 %1175
    %v1178 = vsel %vm299, %v1173, %v1176
    %1180 = vrot.lane.b32.xlu0 %v1178, 64
    %v1181 = vpop.permute.xlu0 %1180
    %vm1183 = vcmask 648704
    %1184 = vst.msk [vmem:[#allocation3] sm:$0x3] %vm1183, %v1181
    %v1185 = vrot.slane %v1127, 5
    %1187 = vrot.lane.b32.xlu0 %v1173, 112
    %v1188 = vpop.permute.xlu0 %1187
    %v1190 = vsel %vm299, %v1185, %v1188
    %1192 = vrot.lane.b32.xlu0 %v1190, 80
    %v1193 = vpop.permute.xlu0 %1192
    %vm1195 = vcmask 779904
    %1196 = vst.msk [vmem:[#allocation3] sm:$0x3] %vm1195, %v1193
    %v1197 = vrot.slane %v1127, 6
    %1199 = vrot.lane.b32.xlu0 %v1185, 112
    %v1200 = vpop.permute.xlu0 %1199
    %v1202 = vsel %vm299, %v1197, %v1200
    %1204 = vrot.lane.b32.xlu0 %v1202, 96
    %v1205 = vpop.permute.xlu0 %1204
    %vm1207 = vcmask 911104
    %1208 = vst.msk [vmem:[#allocation3] sm:$0x3] %vm1207, %v1205
    %1210 = vrot.lane.b32.xlu0 %v1197, 112
    %v1211 = vpop.permute.xlu0 %1210
    %v1213 = vsel %vm299, %v1130, %v1211
    %1215 = vrot.lane.b32.xlu0 %v1213, 112
    %v1216 = vpop.permute.xlu0 %1215
    %vm1218 = vcmask 1042304
    %1219 = vst.msk [vmem:[#allocation3] sm:$0x3] %vm1218, %v1216
    %v1221 = vrot.slane %v1128, 7
    %1222 = vrot.lane.b32.xlu0 %v1221, 112
    %v1223 = vpop.permute.xlu0 %1222
    %v1225 = vsel %vm299, %v1128, %v1223
    %1226 = vst.msk [vmem:[#allocation3 + $0x2] sm:$0x3] %vm1135, %v1225
    %v1227 = vrot.slane %v1128, 1
    %1229 = vrot.lane.b32.xlu0 %v1128, 112
    %v1230 = vpop.permute.xlu0 %1229
    %v1232 = vsel %vm299, %v1227, %v1230
    %1234 = vrot.lane.b32.xlu0 %v1232, 16
    %v1235 = vpop.permute.xlu0 %1234
    %1237 = vst.msk [vmem:[#allocation3 + $0x2] sm:$0x3] %vm1147, %v1235
    %v1238 = vrot.slane %v1128, 2
    %1240 = vrot.lane.b32.xlu0 %v1227, 112
    %v1241 = vpop.permute.xlu0 %1240
    %v1243 = vsel %vm299, %v1238, %v1241
    %1245 = vrot.lane.b32.xlu0 %v1243, 32
    %v1246 = vpop.permute.xlu0 %1245
    %1248 = vst.msk [vmem:[#allocation3 + $0x2] sm:$0x3] %vm1159, %v1246
    %v1249 = vrot.slane %v1128, 3
    %1251 = vrot.lane.b32.xlu0 %v1238, 112
    %v1252 = vpop.permute.xlu0 %1251
    %v1254 = vsel %vm299, %v1249, %v1252
    %1256 = vrot.lane.b32.xlu0 %v1254, 48
    %v1257 = vpop.permute.xlu0 %1256
    %1259 = vst.msk [vmem:[#allocation3 + $0x2] sm:$0x3] %vm1171, %v1257
    %v1260 = vrot.slane %v1128, 4
    %1262 = vrot.lane.b32.xlu0 %v1249, 112
    %v1263 = vpop.permute.xlu0 %1262
    %v1265 = vsel %vm299, %v1260, %v1263
    %1267 = vrot.lane.b32.xlu0 %v1265, 64
    %v1268 = vpop.permute.xlu0 %1267
    %1270 = vst.msk [vmem:[#allocation3 + $0x2] sm:$0x3] %vm1183, %v1268
    %v1271 = vrot.slane %v1128, 5
    %1273 = vrot.lane.b32.xlu0 %v1260, 112
    %v1274 = vpop.permute.xlu0 %1273
    %v1276 = vsel %vm299, %v1271, %v1274
    %1278 = vrot.lane.b32.xlu0 %v1276, 80
    %v1279 = vpop.permute.xlu0 %1278
    %1281 = vst.msk [vmem:[#allocation3 + $0x2] sm:$0x3] %vm1195, %v1279
    %v1282 = vld [vmem:[#allocation3] sm:$0xf]
    %v1283 = vld [vmem:[#allocation12] sm:$0xff]
    %v1284 = vld [vmem:[#allocation12 + $0x8] sm:$0xff]
    %v1285 = vld [vmem:[#allocation12 + $0x10] sm:$0xff]
    %v1286 = vld [vmem:[#allocation12 + $0x18] sm:$0xff]
    %v1287 = vld [vmem:[#allocation12 + $0x20] sm:$0xff]
    %v1288 = vld [vmem:[#allocation12 + $0x28] sm:$0xff]
    %v1289 = vld [vmem:[#allocation12 + $0x30] sm:$0xff]
    %v1290 = vld [vmem:[#allocation12 + $0x38] sm:$0xff]
    %v1291 = vld [vmem:[#allocation12 + $0x40] sm:$0xff]
    %v1292 = vld [vmem:[#allocation12 + $0x48] sm:$0xff]
    %v1293 = vld [vmem:[#allocation12 + $0x50] sm:$0xff]
    %v1294 = vld [vmem:[#allocation12 + $0x58] sm:$0xff]
    %v1295 = vld [vmem:[#allocation12 + $0x60] sm:$0xff]
    %v1296 = vld [vmem:[#allocation12 + $0x68] sm:$0xff]
    %v1297 = vld [vmem:[#allocation12 + $0x70] sm:$0xff]
    %v1298 = vld [vmem:[#allocation12 + $0x78] sm:$0xff]
    %v1299 = vld [vmem:[#allocation12 + $0x80] sm:$0xff]
    %v1300 = vld [vmem:[#allocation12 + $0x88] sm:$0xff]
    %v1301 = vld [vmem:[#allocation12 + $0x90] sm:$0xff]
    %v1302 = vld [vmem:[#allocation12 + $0x98] sm:$0xff]
    %v1303 = vld [vmem:[#allocation12 + $0xa0] sm:$0xff]
    %v1304 = vld [vmem:[#allocation12 + $0xa8] sm:$0xff]
    %v1305 = vld [vmem:[#allocation12 + $0xb0] sm:$0xff]
    %v1306 = vld [vmem:[#allocation12 + $0xb8] sm:$0xff]
    %v1307 = vld [vmem:[#allocation12 + $0xc0] sm:$0xff]
    %v1308 = vld [vmem:[#allocation12 + $0xc8] sm:$0xff]
    %v1309 = vld [vmem:[#allocation12 + $0xd0] sm:$0xff]
    %v1310 = vld [vmem:[#allocation12 + $0xd8] sm:$0xff]
    %v1311 = vld [vmem:[#allocation12 + $0xe0] sm:$0xff]
    %v1312 = vld [vmem:[#allocation12 + $0xe8] sm:$0xff]
    %v1313 = vld [vmem:[#allocation12 + $0xf0] sm:$0xff]
    %v1314 = vld [vmem:[#allocation12 + $0xf8] sm:$0xff]
    %v1315 = vld [vmem:[#allocation12 + $0x100] sm:$0xff]
    %v1316 = vld [vmem:[#allocation12 + $0x108] sm:$0xff]
    %v1317 = vld [vmem:[#allocation12 + $0x110] sm:$0xff]
    %v1318 = vld [vmem:[#allocation12 + $0x118] sm:$0xff]
    %v1319 = vld [vmem:[#allocation12 + $0x120] sm:$0xff]
    %v1320 = vld [vmem:[#allocation12 + $0x128] sm:$0xff]
    %v1321 = vld [vmem:[#allocation12 + $0x130] sm:$0xff]
    %v1322 = vld [vmem:[#allocation12 + $0x138] sm:$0xff]
    %v1323 = vld [vmem:[#allocation12 + $0x140] sm:$0xff]
    %v1324 = vld [vmem:[#allocation12 + $0x148] sm:$0xff]
    %v1325 = vld [vmem:[#allocation12 + $0x150] sm:$0xff]
    %v1326 = vld [vmem:[#allocation12 + $0x158] sm:$0xff]
    %v1327 = vld [vmem:[#allocation12 + $0x160] sm:$0xff]
    %v1328 = vld [vmem:[#allocation12 + $0x168] sm:$0xff]
    %v1329 = vld [vmem:[#allocation12 + $0x170] sm:$0xff]
    %v1330 = vld [vmem:[#allocation12 + $0x178] sm:$0xff]
    %v1331 = vld [vmem:[#allocation12 + $0x180] sm:$0xff]
    %v1332 = vld [vmem:[#allocation12 + $0x188] sm:$0xff]
    %v1333 = vld [vmem:[#allocation12 + $0x190] sm:$0xff]
    %v1334 = vld [vmem:[#allocation12 + $0x198] sm:$0xff]
    %v1335 = vld [vmem:[#allocation12 + $0x1a0] sm:$0xff]
    %v1336 = vld [vmem:[#allocation12 + $0x1a8] sm:$0xff]
    %v1337 = vld [vmem:[#allocation12 + $0x1b0] sm:$0xff]
    %v1338 = vld [vmem:[#allocation12 + $0x1b8] sm:$0xff]
    %v1339 = vld [vmem:[#allocation12 + $0x1c0] sm:$0xff]
    %v1340 = vld [vmem:[#allocation12 + $0x1c8] sm:$0xff]
    %v1341 = vld [vmem:[#allocation12 + $0x1d0] sm:$0xff]
    %v1342 = vld [vmem:[#allocation12 + $0x1d8] sm:$0xff]
    %v1343 = vld [vmem:[#allocation12 + $0x1e0] sm:$0xff]
    %v1344 = vld [vmem:[#allocation12 + $0x1e8] sm:$0xff]
    %v1345 = vld [vmem:[#allocation12 + $0x1f0] sm:$0xff]
    %v1346 = vld [vmem:[#allocation12 + $0x1f8] sm:$0xff]
    %v1347 = vld [vmem:[%s13] sm:$0x3]
    %v1349 = vperm.slane %v1347, 0
    %v1350 = vperm.slane %v1347, 1
    %1354 = vst [vmem:[#allocation1] ss:$4 sm:$0xff] %v1282
    %v1355 = vld.sshfl [vmem:[#allocation1] sm:$0xff pattern:$0x73625140]
    %v1356 = vld.sshfl [vmem:[#allocation1 + $0x8] sm:$0xff pattern:$0x73625140]
    %1359 = vmatpush.msra.mxu0 %v1313
    %1360 = vmatpush.msra.mxu0 %v1311
    %1361 = vmatpush.msra.mxu0 %v1309
    %1362 = vmatpush.msra.mxu0 %v1307
    %1363 = vmatpush.msra.mxu0 %v1305
    %1364 = vmatpush.msra.mxu0 %v1303
    %1365 = vmatpush.msra.mxu0 %v1301
    %1366 = vmatpush.msra.mxu0 %v1299
    %1367 = vmatpush.msra.mxu0 %v1297
    %1368 = vmatpush.msra.mxu0 %v1295
    %1369 = vmatpush.msra.mxu0 %v1293
    %1370 = vmatpush.msra.mxu0 %v1291
    %1371 = vmatpush.msra.mxu0 %v1289
    %1372 = vmatpush.msra.mxu0 %v1287
    %1373 = vmatpush.msra.mxu0 %v1285
    %1374 = vmatpush.msra.mxu0 %v1283
    %1375 = vmatmul.f32.gmra.mxu0 %v1355
    %v1376 = vpop.f32.mrf.mxu0
    %v1377 = vadd.f32 %v1349, %v1376
    %1378 = vdwg.mxu0
    %1379 = vmatpush.msra.mxu0 %v1345
    %1380 = vmatpush.msra.mxu0 %v1343
    %1381 = vmatpush.msra.mxu0 %v1341
    %1382 = vmatpush.msra.mxu0 %v1339
    %1383 = vmatpush.msra.mxu0 %v1337
    %1384 = vmatpush.msra.mxu0 %v1335
    %1385 = vmatpush.msra.mxu0 %v1333
    %1386 = vmatpush.msra.mxu0 %v1331
    %1387 = vmatpush.msra.mxu0 %v1329
    %1388 = vmatpush.msra.mxu0 %v1327
    %1389 = vmatpush.msra.mxu0 %v1325
    %1390 = vmatpush.msra.mxu0 %v1323
    %1391 = vmatpush.msra.mxu0 %v1321
    %1392 = vmatpush.msra.mxu0 %v1319
    %1393 = vmatpush.msra.mxu0 %v1317
    %1394 = vmatpush.msra.mxu0 %v1315
    %1395 = vmatmul.f32.gmra.mxu0 %v1356
    %v1396 = vpop.f32.mrf.mxu0
    %v1397 = vadd.f32 %v1377, %v1396
    %1398 = vdwg.mxu0
    %1399 = vmatpush.msra.mxu0 %v1314
    %1400 = vmatpush.msra.mxu0 %v1312
    %1401 = vmatpush.msra.mxu0 %v1310
    %1402 = vmatpush.msra.mxu0 %v1308
    %1403 = vmatpush.msra.mxu0 %v1306
    %1404 = vmatpush.msra.mxu0 %v1304
    %1405 = vmatpush.msra.mxu0 %v1302
    %1406 = vmatpush.msra.mxu0 %v1300
    %1407 = vmatpush.msra.mxu0 %v1298
    %1408 = vmatpush.msra.mxu0 %v1296
    %1409 = vmatpush.msra.mxu0 %v1294
    %1410 = vmatpush.msra.mxu0 %v1292
    %1411 = vmatpush.msra.mxu0 %v1290
    %1412 = vmatpush.msra.mxu0 %v1288
    %1413 = vmatpush.msra.mxu0 %v1286
    %1414 = vmatpush.msra.mxu0 %v1284
    %1415 = vmatmul.f32.gmra.mxu0 %v1355
    %v1416 = vpop.f32.mrf.mxu0
    %v1417 = vadd.f32 %v1350, %v1416
    %1418 = vdwg.mxu0
    %1419 = vmatpush.msra.mxu0 %v1346
    %1420 = vmatpush.msra.mxu0 %v1344
    %1421 = vmatpush.msra.mxu0 %v1342
    %1422 = vmatpush.msra.mxu0 %v1340
    %1423 = vmatpush.msra.mxu0 %v1338
    %1424 = vmatpush.msra.mxu0 %v1336
    %1425 = vmatpush.msra.mxu0 %v1334
    %1426 = vmatpush.msra.mxu0 %v1332
    %1427 = vmatpush.msra.mxu0 %v1330
    %1428 = vmatpush.msra.mxu0 %v1328
    %1429 = vmatpush.msra.mxu0 %v1326
    %1430 = vmatpush.msra.mxu0 %v1324
    %1431 = vmatpush.msra.mxu0 %v1322
    %1432 = vmatpush.msra.mxu0 %v1320
    %1433 = vmatpush.msra.mxu0 %v1318
    %1434 = vmatpush.msra.mxu0 %v1316
    %1435 = vmatmul.f32.gmra.mxu0 %v1356
    %v1436 = vpop.f32.mrf.mxu0
    %v1437 = vadd.f32 %v1417, %v1436
    %1438 = vdwg.mxu0
    %vm1439 = vcmask 1041408
    %v1440 = vsel %vm1439, %v1397, -inf
    %v1441 = vsel %vm1439, %v1437, -inf
    %v1442 = vmax.f32 %v1440, %v1441
    %1443 = vmax.xlane.f32.xlu0 %v1442
    %v1444 = vpop.xlane.xlu0 %1443
    %v1445 = vsub.f32 %v1397, %v1444
    %v1446 = vsub.f32 %v1437, %v1444
    %v1447 = vmul.f32 %v1445, 1.442695
    %v1448 = vpow.pop %v1447
    %v1449 = vmul.f32 %v1446, 1.442695
    %v1450 = vpow.pop %v1449
    %v1451 = vsel %vm1439, %v1448, 0.0
    %v1452 = vsel %vm1439, %v1450, 0.0
    %v1453 = vadd.f32 %v1451, %v1452
    %1454 = vadd.xlane.f32.xlu0 %v1453
    %v1455 = vpop.xlane.xlu0 %1454
    %v1456 = vrcp.pop %v1455
    %v1457 = vmul.f32 %v1455, %v1456
    %v1458 = vsub.f32 1.0, %v1457
    %v1459 = vmul.f32 %v1456, %v1458
    %v1460 = vadd.f32 %v1456, %v1459
    %vm1461 = vweird.f32 %v1455
    %vm1462 = vweird.f32 %v1456
    %vm1463 = vmor %vm1461, %vm1462
    %v1464 = vsel %vm1463, %v1456, %v1460
    %v1465 = vand.u32 2147483647, %v1455
    %vm1466 = vcmp.eq.f32.partialorder %v1465, 8.507059e+37
    %v1467 = vand.u32 %v1455, 2147483648
    %v1468 = vor.u32 1.1754944e-38, %v1467
    %v1469 = vsel %vm1466, %v1468, %v1464
    %v1470 = vmul.f32 %v1448, %v1469
    %v1471 = vmul.f32 %v1450, %v1469
    %v1474 = vrot.slane %v1471, 6
    %v1475 = vsel %vm1439, %v1470, %v1474
    %1477 = vst [vmem:[#allocation13] sm:$0xf] %v1475
    // Predicated region
    $region78: #{tpu_custom_call.1} parent=1 // pred_check
      _
    $region79: #{tpu_custom_call.1} parent=1 // pred_check_branch
      %1479 = sbr.rel (0) target = $region81
    $region80: #{tpu_custom_call.1} parent=1 // pred_region
      %1481 = vsyncadd [#allocation6], 0
      %s1483 = sshll.u32 [#allocation13], 4
      %s1484 = int_to_ptr.vmem [resolvable:$true] %s1483
      %s1485 = sshll.u32 %s14, 4
      %s1486 = int_to_ptr.hbm [resolvable:$true] %s1485
      %1488 = dma.vmem_to_hbm [thread:$0]  %s1484, 64, %s1486, [#allocation6]
    $region81: #{tpu_custom_call.1} parent=1 // pred_fallthru
      _
    // Predicated region
    $region82: #{tpu_custom_call.1} parent=1 // pred_check
      _
    $region83: #{tpu_custom_call.1} parent=1 // pred_check_branch
      %1490 = sbr.rel (0) target = $region85
    $region84: #{tpu_custom_call.1} parent=1 // pred_region
      %1492 = dma.done [#allocation6], 64
    $region85: #{tpu_custom_call.1} parent=1 // pred_fallthru
      _
    %1493 = vsyncpa [#allocation5], 1
    %1494 = vsyncpa [#allocation8], 1
    %1495 = vsyncpa [#allocation11], 1
    %1496 = vsyncpa [#allocation6], 1

</llo_original>
